<compile_context>
chip_gen: v5e
topology: v5e:2x2
jax: 0.10.0
libtpu: 0.0.40
codegen_flags: <defaults>
</compile_context>

<pallas_src>
import functools

import jax
import jax.numpy as jnp
from jax.experimental import pallas as pl
from jax.experimental.pallas import tpu as pltpu


NEG_SLOPE = 0.01        # torch.nn.functional.leaky_relu default
IN_DIM = 30             # width * height
IN_CAT_PAD = 64         # concat(us, them) = 60 features, zero-padded to 64
HID0 = 1024
HID1 = 256
HID2 = 32
OUT_PAD = 8             # real output is column 0; padded for a cheap store
TILE_B_MAX = 2048       # batch tile upper bound (bf16 intermediates)
SUBLANE_ALIGN = 16      # bf16-friendly batch-tile alignment
VMEM_LIMIT_BYTES = 32 * 1024 * 1024  # explicit scoped-VMEM budget (all parts)


def _leaky_relu(x):
    # max(x, a*x) == leaky_relu(x) for 0 < a < 1  (mul+max instead of cmp+sel+mul)
    return jnp.maximum(x, NEG_SLOPE * x)


def _round_up(n, m):
    return ((n + m - 1) // m) * m


def _cdiv(a, b):
    return (a + b - 1) // b


def mlp_kernel(xin_ref, wb_ref, bb_ref, w1_ref, b1_ref, w2_ref, b2_ref,
               wo_ref, bo_ref, out_ref):
    # Layer 0: fused "transformer" on [us | them] via a block-diagonal weight.
    # K=64 is structurally small for the MXU (K=30 per half is the model's
    # shape); don't widen artificially — bf16 + long M are the real levers.
    x = jnp.dot(xin_ref[...], wb_ref[...],
                preferred_element_type=jnp.float32) + bb_ref[...]
    x = _leaky_relu(x)

    # l1: 1024 -> 256
    h1 = jnp.dot(x.astype(jnp.bfloat16), w1_ref[...],
                 preferred_element_type=jnp.float32) + b1_ref[...]
    h1 = _leaky_relu(h1)

    # l2: 256 -> 32
    h2 = jnp.dot(h1.astype(jnp.bfloat16), w2_ref[...],
                 preferred_element_type=jnp.float32) + b2_ref[...]
    h2 = _leaky_relu(h2)

    # output: 32 -> 1, lane-padded to 32 -> OUT_PAD for an aligned store.
    out = jnp.dot(h2.astype(jnp.bfloat16), wo_ref[...],
                  preferred_element_type=jnp.float32) + bo_ref[...]
    out_ref[...] = out.astype(out_ref.dtype)


def prepare_params(params):
    """One-time layout prep:
      * block-diagonal layer-0 weight [64, 1024] (us half -> cols 0:512,
        them half -> cols 512:1024), bias [1, 1024]
      * transpose W[out,in] -> [in,out] for l1/l2
      * zero-pad the 32->1 output layer to 32->OUT_PAD
      * cast all weights to bf16 (biases stay f32 and are added post-accumulate)
    """
    wt, bt, w1, b1, w2, b2, wo, bo = params
    wt_t = wt.T                                         # [30, 512]
    wb = jnp.zeros((IN_CAT_PAD, HID0), jnp.float32)
    wb = wb.at[:IN_DIM, :512].set(wt_t)                 # acts on us
    wb = wb.at[IN_DIM:2 * IN_DIM, 512:].set(wt_t)       # acts on them
    bb = jnp.concatenate([bt, bt]).reshape(1, -1)       # [1, 1024]

    w1_t = w1.T                                         # [1024, 256]
    w2_t = w2.T                                         # [256, 32]
    wo_pad = jnp.zeros((HID2, OUT_PAD), jnp.float32).at[:, :1].set(wo.T)
    bo_pad = jnp.zeros((1, OUT_PAD), jnp.float32).at[:, :1].set(bo.reshape(1, -1))

    return (wb.astype(jnp.bfloat16), bb,
            w1_t.astype(jnp.bfloat16), b1.reshape(1, -1),
            w2_t.astype(jnp.bfloat16), b2.reshape(1, -1),
            wo_pad.astype(jnp.bfloat16), bo_pad)


@functools.partial(jax.jit, static_argnames=("tile_b_max",))
def model_forward(us, them, prepared, *, tile_b_max=TILE_B_MAX):
    """us, them: [B, 30] float32. prepared = prepare_params(params).
    Returns [B, 1] float32."""
    B = us.shape[0]

    # --- batch tiling -------------------------------------------------------
    # Balance tiles to minimize pad waste; force >= 2 tiles when feasible so
    # the "parallel" batch axis can shard across v7x's two TensorCores.
    n_tiles = max(2, _cdiv(B, tile_b_max))
    tile_b = _round_up(_cdiv(B, n_tiles), SUBLANE_ALIGN)
    tile_b = min(tile_b, _round_up(tile_b_max, SUBLANE_ALIGN))
    b_pad = _round_up(B, tile_b)
    grid = (b_pad // tile_b,)

    # --- input prep: concat us/them features, pad, cast to bf16 -------------
    x_cat = jnp.concatenate([us, them], axis=-1)                 # [B, 60]
    x_in = jnp.pad(x_cat, ((0, b_pad - B), (0, IN_CAT_PAD - 2 * IN_DIM)))
    x_in = x_in.astype(jnp.bfloat16)                             # [b_pad, 64]

    in_spec = pl.BlockSpec((tile_b, IN_CAT_PAD), lambda i: (i, 0))
    # Weights / biases: whole array, same block every step -> stay in VMEM.
    weight_specs = [pl.BlockSpec(w.shape, lambda i: (0, 0)) for w in prepared]
    out_spec = pl.BlockSpec((tile_b, OUT_PAD), lambda i: (i, 0))

    # Advisory cost estimate for XLA's scheduler.
    flops = 2 * b_pad * (IN_CAT_PAD * HID0 + HID0 * HID1 + HID1 * HID2
                         + HID2 * OUT_PAD)
    weight_bytes = sum(int(w.size) * w.dtype.itemsize for w in prepared)
    bytes_accessed = (b_pad * IN_CAT_PAD * 2        # bf16 input
                      + b_pad * OUT_PAD * 4         # f32 output
                      + weight_bytes)
    cost = pl.CostEstimate(flops=flops, transcendentals=0,
                           bytes_accessed=bytes_accessed)

    out_padded = pl.pallas_call(
        mlp_kernel,
        out_shape=jax.ShapeDtypeStruct((b_pad, OUT_PAD), jnp.float32),
        grid=grid,
        in_specs=[in_spec] + weight_specs,
        out_specs=out_spec,
        compiler_params=pltpu.CompilerParams(
            dimension_semantics=("parallel",),
            vmem_limit_bytes=VMEM_LIMIT_BYTES),
        cost_estimate=cost,
    )(x_in, *prepared)

    return out_padded[:B, :1]


def init_params(key):
    """Deterministic params matching the PyTorch module shapes (W[out, in])."""
    ks = jax.random.split(key, 8)

    def linear(kw, kb, out_dim, in_dim):
        bound = 1.0 / jnp.sqrt(in_dim)
        w = jax.random.uniform(kw, (out_dim, in_dim), jnp.float32, -bound, bound)
        b = jax.random.uniform(kb, (out_dim,), jnp.float32, -bound, bound)
        return w, b

    wt, bt = linear(ks[0], ks[1], 512, IN_DIM)   # transformer: Linear(30, 512)
    w1, b1 = linear(ks[2], ks[3], 256, 1024)     # l1: Linear(1024, 256)
    w2, b2 = linear(ks[4], ks[5], 32, 256)       # l2: Linear(256, 32)
    wo, bo = linear(ks[6], ks[7], 1, 32)         # output: Linear(32, 1)
    return (wt, bt, w1, b1, w2, b2, wo, bo)


def reference_forward(us, them, params):
    wt, bt, w1, b1, w2, b2, wo, bo = params
    us_x = us @ wt.T + bt
    them_x = them @ wt.T + bt
    x = jnp.concatenate([us_x, them_x], axis=-1)
    x = jnp.where(x >= 0, x, NEG_SLOPE * x)
    x = x @ w1.T + b1
    x = jnp.where(x >= 0, x, NEG_SLOPE * x)
    x = x @ w2.T + b2
    x = jnp.where(x >= 0, x, NEG_SLOPE * x)
    return x @ wo.T + bo


if __name__ == "__main__":
    key = jax.random.PRNGKey(0)
    kp, ku, kt = jax.random.split(key, 3)

    params = init_params(kp)
    prepared = prepare_params(params)

    B = 8
    width, height = 6, 5
    us = jax.random.normal(ku, (B, width * height), jnp.float32)
    them = jax.random.normal(kt, (B, width * height), jnp.float32)

    out = model_forward(us, them, prepared)
    out = jax.block_until_ready(out)

    ref = reference_forward(us, them, params)
    assert out.shape == (B, 1)
    # bf16 matmuls (f32 accumulation) -> relaxed tolerance vs. the f32 reference.
    assert jnp.allclose(out, ref, atol=5e-2, rtol=5e-2), (
        f"max abs diff {float(jnp.max(jnp.abs(out - ref)))}")

    print("KERNEL_OK")
</pallas_src>

<mosaic_0001>
module attributes {stable_mosaic.version = 11 : i64} {
  func.func @mlp_kernel(%arg0: i32, %arg1: memref<16x64xbf16, #tpu.memory_space<vmem>>, %arg2: memref<64x1024xbf16, #tpu.memory_space<vmem>>, %arg3: memref<1x1024xf32, #tpu.memory_space<vmem>>, %arg4: memref<1024x256xbf16, #tpu.memory_space<vmem>>, %arg5: memref<1x256xf32, #tpu.memory_space<vmem>>, %arg6: memref<256x32xbf16, #tpu.memory_space<vmem>>, %arg7: memref<1x32xf32, #tpu.memory_space<vmem>>, %arg8: memref<32x8xbf16, #tpu.memory_space<vmem>>, %arg9: memref<1x8xf32, #tpu.memory_space<vmem>>, %arg10: memref<16x8xf32, #tpu.memory_space<vmem>>) attributes {dimension_semantics = [#tpu.dimension_semantics<parallel>], iteration_bounds = array<i64: 1>, scalar_prefetch = 0 : i64, scratch_operands = 0 : i64, tpu.core_type = #tpu.core_type<tc>, window_params = [{transform_indices = @transform_0, window_bounds = array<i64: 16, 64>}, {pipeline_mode = #tpu.pipeline_mode<synchronous>, transform_indices = @transform_1, window_bounds = array<i64: 64, 1024>}, {pipeline_mode = #tpu.pipeline_mode<synchronous>, transform_indices = @transform_2, window_bounds = array<i64: 1, 1024>}, {pipeline_mode = #tpu.pipeline_mode<synchronous>, transform_indices = @transform_3, window_bounds = array<i64: 1024, 256>}, {pipeline_mode = #tpu.pipeline_mode<synchronous>, transform_indices = @transform_4, window_bounds = array<i64: 1, 256>}, {pipeline_mode = #tpu.pipeline_mode<synchronous>, transform_indices = @transform_5, window_bounds = array<i64: 256, 32>}, {pipeline_mode = #tpu.pipeline_mode<synchronous>, transform_indices = @transform_6, window_bounds = array<i64: 1, 32>}, {pipeline_mode = #tpu.pipeline_mode<synchronous>, transform_indices = @transform_7, window_bounds = array<i64: 32, 8>}, {pipeline_mode = #tpu.pipeline_mode<synchronous>, transform_indices = @transform_8, window_bounds = array<i64: 1, 8>}, {transform_indices = @transform_9, window_bounds = array<i64: 16, 8>}]} {
    %c0 = arith.constant 0 : index
    %c0_0 = arith.constant 0 : index
    %0 = vector.load %arg1[%c0, %c0_0] : memref<16x64xbf16, #tpu.memory_space<vmem>>, vector<16x64xbf16>
    %c0_1 = arith.constant 0 : index
    %c0_2 = arith.constant 0 : index
    %1 = vector.load %arg2[%c0_1, %c0_2] : memref<64x1024xbf16, #tpu.memory_space<vmem>>, vector<64x1024xbf16>
    %cst = arith.constant dense<0.000000e+00> : vector<16x1024xf32>
    %2 = tpu.matmul %0, %1, %cst {dimension_numbers = #tpu.dot_dimension_numbers<[1], [0], [0], [1], [0, 0, 1, 1], [], []>} : vector<16x64xbf16>, vector<64x1024xbf16>, vector<16x1024xf32> -> vector<16x1024xf32>
    %c0_3 = arith.constant 0 : index
    %c0_4 = arith.constant 0 : index
    %3 = vector.load %arg3[%c0_3, %c0_4] : memref<1x1024xf32, #tpu.memory_space<vmem>>, vector<1x1024xf32>
    %4 = vector.broadcast %3 : vector<1x1024xf32> to vector<16x1024xf32>
    %5 = arith.addf %2, %4 : vector<16x1024xf32>
    %cst_5 = arith.constant 0.00999999977 : f32
    %6 = vector.broadcast %cst_5 : f32 to vector<16x1024xf32>
    %7 = arith.mulf %6, %5 : vector<16x1024xf32>
    %8 = arith.maximumf %5, %7 : vector<16x1024xf32>
    %9 = arith.truncf %8 : vector<16x1024xf32> to vector<16x1024xbf16>
    %c0_6 = arith.constant 0 : index
    %c0_7 = arith.constant 0 : index
    %10 = vector.load %arg4[%c0_6, %c0_7] : memref<1024x256xbf16, #tpu.memory_space<vmem>>, vector<1024x256xbf16>
    %cst_8 = arith.constant dense<0.000000e+00> : vector<16x256xf32>
    %11 = tpu.matmul %9, %10, %cst_8 {dimension_numbers = #tpu.dot_dimension_numbers<[1], [0], [0], [1], [0, 0, 1, 1], [], []>} : vector<16x1024xbf16>, vector<1024x256xbf16>, vector<16x256xf32> -> vector<16x256xf32>
    %c0_9 = arith.constant 0 : index
    %c0_10 = arith.constant 0 : index
    %12 = vector.load %arg5[%c0_9, %c0_10] : memref<1x256xf32, #tpu.memory_space<vmem>>, vector<1x256xf32>
    %13 = vector.broadcast %12 : vector<1x256xf32> to vector<16x256xf32>
    %14 = arith.addf %11, %13 : vector<16x256xf32>
    %cst_11 = arith.constant 0.00999999977 : f32
    %15 = vector.broadcast %cst_11 : f32 to vector<16x256xf32>
    %16 = arith.mulf %15, %14 : vector<16x256xf32>
    %17 = arith.maximumf %14, %16 : vector<16x256xf32>
    %18 = arith.truncf %17 : vector<16x256xf32> to vector<16x256xbf16>
    %c0_12 = arith.constant 0 : index
    %c0_13 = arith.constant 0 : index
    %19 = vector.load %arg6[%c0_12, %c0_13] : memref<256x32xbf16, #tpu.memory_space<vmem>>, vector<256x32xbf16>
    %cst_14 = arith.constant dense<0.000000e+00> : vector<16x32xf32>
    %20 = tpu.matmul %18, %19, %cst_14 {dimension_numbers = #tpu.dot_dimension_numbers<[1], [0], [0], [1], [0, 0, 1, 1], [], []>} : vector<16x256xbf16>, vector<256x32xbf16>, vector<16x32xf32> -> vector<16x32xf32>
    %c0_15 = arith.constant 0 : index
    %c0_16 = arith.constant 0 : index
    %21 = vector.load %arg7[%c0_15, %c0_16] : memref<1x32xf32, #tpu.memory_space<vmem>>, vector<1x32xf32>
    %22 = vector.broadcast %21 : vector<1x32xf32> to vector<16x32xf32>
    %23 = arith.addf %20, %22 : vector<16x32xf32>
    %cst_17 = arith.constant 0.00999999977 : f32
    %24 = vector.broadcast %cst_17 : f32 to vector<16x32xf32>
    %25 = arith.mulf %24, %23 : vector<16x32xf32>
    %26 = arith.maximumf %23, %25 : vector<16x32xf32>
    %27 = arith.truncf %26 : vector<16x32xf32> to vector<16x32xbf16>
    %c0_18 = arith.constant 0 : index
    %c0_19 = arith.constant 0 : index
    %28 = vector.load %arg8[%c0_18, %c0_19] : memref<32x8xbf16, #tpu.memory_space<vmem>>, vector<32x8xbf16>
    %cst_20 = arith.constant dense<0.000000e+00> : vector<16x8xf32>
    %29 = tpu.matmul %27, %28, %cst_20 {dimension_numbers = #tpu.dot_dimension_numbers<[1], [0], [0], [1], [0, 0, 1, 1], [], []>} : vector<16x32xbf16>, vector<32x8xbf16>, vector<16x8xf32> -> vector<16x8xf32>
    %c0_21 = arith.constant 0 : index
    %c0_22 = arith.constant 0 : index
    %30 = vector.load %arg9[%c0_21, %c0_22] : memref<1x8xf32, #tpu.memory_space<vmem>>, vector<1x8xf32>
    %31 = vector.broadcast %30 : vector<1x8xf32> to vector<16x8xf32>
    %32 = arith.addf %29, %31 : vector<16x8xf32>
    %c0_23 = arith.constant 0 : index
    %c0_24 = arith.constant 0 : index
    %33 = vector.load %arg10[%c0_23, %c0_24] : memref<16x8xf32, #tpu.memory_space<vmem>>, vector<16x8xf32>
    tpu.vector_store %arg10[%c0_23, %c0_24], %32 {strides = array<i32>} : memref<16x8xf32, #tpu.memory_space<vmem>>, vector<16x8xf32>,
    return
  }
  func.func @transform_0(%arg0: i32) -> (i32, i32) {
    %c0_i32 = arith.constant 0 : i32
    %c0_i32_0 = arith.constant 0 : i32
    return %arg0, %c0_i32 : i32, i32
  }
  func.func @transform_1(%arg0: i32) -> (i32, i32) {
    %c0_i32 = arith.constant 0 : i32
    %c0_i32_0 = arith.constant 0 : i32
    %c0_i32_1 = arith.constant 0 : i32
    return %c0_i32, %c0_i32_0 : i32, i32
  }
  func.func @transform_2(%arg0: i32) -> (i32, i32) {
    %c0_i32 = arith.constant 0 : i32
    %c0_i32_0 = arith.constant 0 : i32
    %c0_i32_1 = arith.constant 0 : i32
    return %c0_i32, %c0_i32_0 : i32, i32
  }
  func.func @transform_3(%arg0: i32) -> (i32, i32) {
    %c0_i32 = arith.constant 0 : i32
    %c0_i32_0 = arith.constant 0 : i32
    %c0_i32_1 = arith.constant 0 : i32
    return %c0_i32, %c0_i32_0 : i32, i32
  }
  func.func @transform_4(%arg0: i32) -> (i32, i32) {
    %c0_i32 = arith.constant 0 : i32
    %c0_i32_0 = arith.constant 0 : i32
    %c0_i32_1 = arith.constant 0 : i32
    return %c0_i32, %c0_i32_0 : i32, i32
  }
  func.func @transform_5(%arg0: i32) -> (i32, i32) {
    %c0_i32 = arith.constant 0 : i32
    %c0_i32_0 = arith.constant 0 : i32
    %c0_i32_1 = arith.constant 0 : i32
    return %c0_i32, %c0_i32_0 : i32, i32
  }
  func.func @transform_6(%arg0: i32) -> (i32, i32) {
    %c0_i32 = arith.constant 0 : i32
    %c0_i32_0 = arith.constant 0 : i32
    %c0_i32_1 = arith.constant 0 : i32
    return %c0_i32, %c0_i32_0 : i32, i32
  }
  func.func @transform_7(%arg0: i32) -> (i32, i32) {
    %c0_i32 = arith.constant 0 : i32
    %c0_i32_0 = arith.constant 0 : i32
    %c0_i32_1 = arith.constant 0 : i32
    return %c0_i32, %c0_i32_0 : i32, i32
  }
  func.func @transform_8(%arg0: i32) -> (i32, i32) {
    %c0_i32 = arith.constant 0 : i32
    %c0_i32_0 = arith.constant 0 : i32
    %c0_i32_1 = arith.constant 0 : i32
    return %c0_i32, %c0_i32_0 : i32, i32
  }
  func.func @transform_9(%arg0: i32) -> (i32, i32) {
    %c0_i32 = arith.constant 0 : i32
    %c0_i32_0 = arith.constant 0 : i32
    return %arg0, %c0_i32 : i32, i32
  }
}

</mosaic_0001>

<llo_original>
// kernel: model_forward.1
$region0: #{model_forward.1}
  #allocation0 [shape = 'u32[]', space=smem, size = 0x4, offset = 0x4, fixed_abs, tag = 'smem constant byte address 0x4 - core index']
  #allocation1 [shape = 'u32[72,128]{1,0:T(1,128)}', space=vmem, size = 0x9000, scoped, tag = 'internal scratch']
  %s0 = inlined_call_operand.vmem [shape: bf16[16,64], index: 0, kind: input, shape index: {}]
  %s1 = inlined_call_operand.hbm [shape: bf16[64,1024], index: 1, kind: input, shape index: {}]
  %s2 = inlined_call_operand.vmem [shape: f32[1,1024], index: 2, kind: input, shape index: {}]
  %s3 = inlined_call_operand.hbm [shape: bf16[1024,256], index: 3, kind: input, shape index: {}]
  %s4 = inlined_call_operand.vmem [shape: f32[1,256], index: 4, kind: input, shape index: {}]
  %s5 = inlined_call_operand.vmem [shape: bf16[256,32], index: 5, kind: input, shape index: {}]
  %s6 = inlined_call_operand.vmem [shape: f32[1,32], index: 6, kind: input, shape index: {}]
  %s7 = inlined_call_operand.vmem [shape: bf16[32,8], index: 7, kind: input, shape index: {}]
  %s8 = inlined_call_operand.vmem [shape: f32[1,8], index: 8, kind: input, shape index: {}]
  %s9 = inlined_call_operand.vmem [shape: f32[16,8], index: 9, kind: output, shape index: {}]
  %s10 = sld [smem:[#allocation0]]
  $region54: #{model_forward.1} parent=0
    _
  %s12 = ssub.s32 1, %s10
  %s13 = scalar_select 0, %s12, %s10
  $region1: #{model_forward.1} parent=0
    #allocation2 [shape = 'u8[131072]{0}', space=vmem, size = 0x20000, scoped, tag = 'input window, operand 1, single buffered']
    #allocation3 [shape = 's32[1]{0}', space=sflag, size = 0x4, scoped, tag = 'scoped memory for model_forward.1']
    #allocation4 [shape = 'u8[524288]{0}', space=vmem, size = 0x80000, scoped, tag = 'input window, operand 3, single buffered']
    #allocation5 [shape = 's32[1]{0}', space=sflag, size = 0x4, scoped, tag = 'scoped memory for model_forward.1']
    %14 = vsyncpa [#allocation3], 0
    %15 = vsyncpa [#allocation5], 0
    // Predicated region
    $region2: #{model_forward.1} parent=1 // pred_check
      _
    $region3: #{model_forward.1} parent=1 // pred_check_branch
      %17 = sbr.rel (0) target = $region5
    $region4: #{model_forward.1} parent=1 // pred_region
      _
    $region5: #{model_forward.1} parent=1 // pred_fallthru
      _
    // Predicated region
    $region6: #{model_forward.1} parent=1 // pred_check
      _
    $region7: #{model_forward.1} parent=1 // pred_check_branch
      %19 = sbr.rel (0) target = $region9
    $region8: #{model_forward.1} parent=1 // pred_region
      %21 = vsyncadd [#allocation3], 0
      %s22 = sshll.u32 %s1, 4
      %s23 = int_to_ptr.hbm [resolvable:$true] %s22
      %s24 = sshll.u32 [#allocation2], 4
      %s25 = int_to_ptr.vmem [resolvable:$true] %s24
      %30 = dma.hbm_to_vmem [thread:$0]  %s23, 4096, %s25, [#allocation3], 512, 512, 32
    $region9: #{model_forward.1} parent=1 // pred_fallthru
      _
    // Predicated region
    $region10: #{model_forward.1} parent=1 // pred_check
      _
    $region11: #{model_forward.1} parent=1 // pred_check_branch
      %32 = sbr.rel (0) target = $region13
    $region12: #{model_forward.1} parent=1 // pred_region
      _
    $region13: #{model_forward.1} parent=1 // pred_fallthru
      _
    // Predicated region
    $region14: #{model_forward.1} parent=1 // pred_check
      _
    $region15: #{model_forward.1} parent=1 // pred_check_branch
      %34 = sbr.rel (0) target = $region17
    $region16: #{model_forward.1} parent=1 // pred_region
      %36 = vsyncadd [#allocation5], 0
      %s37 = sshll.u32 %s3, 4
      %s38 = int_to_ptr.hbm [resolvable:$true] %s37
      %s39 = sshll.u32 [#allocation4], 4
      %s40 = int_to_ptr.vmem [resolvable:$true] %s39
      %45 = dma.hbm_to_vmem [thread:$0]  %s38, 16384, %s40, [#allocation5], 128, 128, 8
    $region17: #{model_forward.1} parent=1 // pred_fallthru
      _
    // Predicated region
    $region18: #{model_forward.1} parent=1 // pred_check
      _
    $region19: #{model_forward.1} parent=1 // pred_check_branch
      %47 = sbr.rel (0) target = $region21
    $region20: #{model_forward.1} parent=1 // pred_region
      _
    $region21: #{model_forward.1} parent=1 // pred_fallthru
      _
    // Predicated region
    $region22: #{model_forward.1} parent=1 // pred_check
      _
    $region23: #{model_forward.1} parent=1 // pred_check_branch
      %49 = sbr.rel (0) target = $region25
    $region24: #{model_forward.1} parent=1 // pred_region
      _
    $region25: #{model_forward.1} parent=1 // pred_fallthru
      _
    // Predicated region
    $region26: #{model_forward.1} parent=1 // pred_check
      _
    $region27: #{model_forward.1} parent=1 // pred_check_branch
      %51 = sbr.rel (0) target = $region29
    $region28: #{model_forward.1} parent=1 // pred_region
      _
    $region29: #{model_forward.1} parent=1 // pred_fallthru
      _
    // Predicated region
    $region30: #{model_forward.1} parent=1 // pred_check
      _
    $region31: #{model_forward.1} parent=1 // pred_check_branch
      %53 = sbr.rel (0) target = $region33
    $region32: #{model_forward.1} parent=1 // pred_region
      _
    $region33: #{model_forward.1} parent=1 // pred_fallthru
      _
    // Predicated region
    $region34: #{model_forward.1} parent=1 // pred_check
      _
    $region35: #{model_forward.1} parent=1 // pred_check_branch
      %55 = sbr.rel (0) target = $region37
    $region36: #{model_forward.1} parent=1 // pred_region
      _
    $region37: #{model_forward.1} parent=1 // pred_fallthru
      _
    // Predicated region
    $region38: #{model_forward.1} parent=1 // pred_check
      _
    $region39: #{model_forward.1} parent=1 // pred_check_branch
      %57 = sbr.rel (0) target = $region41
    $region40: #{model_forward.1} parent=1 // pred_region
      %59 = dma.done [#allocation3], 4096
    $region41: #{model_forward.1} parent=1 // pred_fallthru
      _
    // Predicated region
    $region42: #{model_forward.1} parent=1 // pred_check
      _
    $region43: #{model_forward.1} parent=1 // pred_check_branch
      %61 = sbr.rel (0) target = $region45
    $region44: #{model_forward.1} parent=1 // pred_region
      %63 = dma.done [#allocation5], 16384
    $region45: #{model_forward.1} parent=1 // pred_fallthru
      _
    %v65 = vld [vmem:[%s0] sm:$0xf]
    %v66 = vld [vmem:[%s0 + $0x4] sm:$0xf]
    %v67 = vld [vmem:[#allocation2] sm:$0xff]
    %v68 = vld [vmem:[#allocation2 + $0x8] sm:$0xff]
    %v69 = vld [vmem:[#allocation2 + $0x10] sm:$0xff]
    %v70 = vld [vmem:[#allocation2 + $0x18] sm:$0xff]
    %v71 = vld [vmem:[#allocation2 + $0x20] sm:$0xff]
    %v72 = vld [vmem:[#allocation2 + $0x28] sm:$0xff]
    %v73 = vld [vmem:[#allocation2 + $0x30] sm:$0xff]
    %v74 = vld [vmem:[#allocation2 + $0x38] sm:$0xff]
    %v75 = vld [vmem:[#allocation2 + $0x40] sm:$0xff]
    %v76 = vld [vmem:[#allocation2 + $0x48] sm:$0xff]
    %v77 = vld [vmem:[#allocation2 + $0x50] sm:$0xff]
    %v78 = vld [vmem:[#allocation2 + $0x58] sm:$0xff]
    %v79 = vld [vmem:[#allocation2 + $0x60] sm:$0xff]
    %v80 = vld [vmem:[#allocation2 + $0x68] sm:$0xff]
    %v81 = vld [vmem:[#allocation2 + $0x70] sm:$0xff]
    %v82 = vld [vmem:[#allocation2 + $0x78] sm:$0xff]
    %v83 = vld [vmem:[#allocation2 + $0x80] sm:$0xff]
    %v84 = vld [vmem:[#allocation2 + $0x88] sm:$0xff]
    %v85 = vld [vmem:[#allocation2 + $0x90] sm:$0xff]
    %v86 = vld [vmem:[#allocation2 + $0x98] sm:$0xff]
    %v87 = vld [vmem:[#allocation2 + $0xa0] sm:$0xff]
    %v88 = vld [vmem:[#allocation2 + $0xa8] sm:$0xff]
    %v89 = vld [vmem:[#allocation2 + $0xb0] sm:$0xff]
    %v90 = vld [vmem:[#allocation2 + $0xb8] sm:$0xff]
    %v91 = vld [vmem:[#allocation2 + $0xc0] sm:$0xff]
    %v92 = vld [vmem:[#allocation2 + $0xc8] sm:$0xff]
    %v93 = vld [vmem:[#allocation2 + $0xd0] sm:$0xff]
    %v94 = vld [vmem:[#allocation2 + $0xd8] sm:$0xff]
    %v95 = vld [vmem:[#allocation2 + $0xe0] sm:$0xff]
    %v96 = vld [vmem:[#allocation2 + $0xe8] sm:$0xff]
    %v97 = vld [vmem:[#allocation2 + $0xf0] sm:$0xff]
    %v98 = vld [vmem:[#allocation2 + $0xf8] sm:$0xff]
    %v99 = vld [vmem:[%s2] sm:$0xff]
    %v101 = vperm.slane %v99, 0
    %v102 = vperm.slane %v99, 1
    %v103 = vperm.slane %v99, 2
    %v104 = vperm.slane %v99, 3
    %v105 = vperm.slane %v99, 4
    %v106 = vperm.slane %v99, 5
    %v107 = vperm.slane %v99, 6
    %v108 = vperm.slane %v99, 7
    %v119 = vunpack.c.l.b16 %v65
    %v120 = vunpack.c.l.b16 %v66
    %v121 = vpack.c.b16 %v120, %v119
    %v154 = vunpack.c.l.b16 %v67
    %v155 = vunpack.c.h.b16 %v67
    %v156 = vunpack.c.l.b16 %v68
    %v157 = vunpack.c.h.b16 %v68
    %v158 = vunpack.c.l.b16 %v69
    %v159 = vunpack.c.h.b16 %v69
    %v160 = vunpack.c.l.b16 %v70
    %v161 = vunpack.c.h.b16 %v70
    %v162 = vunpack.c.l.b16 %v71
    %v163 = vunpack.c.h.b16 %v71
    %v164 = vunpack.c.l.b16 %v72
    %v165 = vunpack.c.h.b16 %v72
    %v166 = vunpack.c.l.b16 %v73
    %v167 = vunpack.c.h.b16 %v73
    %v168 = vunpack.c.l.b16 %v74
    %v169 = vunpack.c.h.b16 %v74
    %v170 = vunpack.c.l.b16 %v75
    %v171 = vunpack.c.h.b16 %v75
    %v172 = vunpack.c.l.b16 %v76
    %v173 = vunpack.c.h.b16 %v76
    %v174 = vunpack.c.l.b16 %v77
    %v175 = vunpack.c.h.b16 %v77
    %v176 = vunpack.c.l.b16 %v78
    %v177 = vunpack.c.h.b16 %v78
    %v178 = vunpack.c.l.b16 %v79
    %v179 = vunpack.c.h.b16 %v79
    %v180 = vunpack.c.l.b16 %v80
    %v181 = vunpack.c.h.b16 %v80
    %v182 = vunpack.c.l.b16 %v81
    %v183 = vunpack.c.h.b16 %v81
    %v184 = vunpack.c.l.b16 %v82
    %v185 = vunpack.c.h.b16 %v82
    %v186 = vunpack.c.l.b16 %v83
    %v187 = vunpack.c.h.b16 %v83
    %v188 = vunpack.c.l.b16 %v84
    %v189 = vunpack.c.h.b16 %v84
    %v190 = vunpack.c.l.b16 %v85
    %v191 = vunpack.c.h.b16 %v85
    %v192 = vunpack.c.l.b16 %v86
    %v193 = vunpack.c.h.b16 %v86
    %v194 = vunpack.c.l.b16 %v87
    %v195 = vunpack.c.h.b16 %v87
    %v196 = vunpack.c.l.b16 %v88
    %v197 = vunpack.c.h.b16 %v88
    %v198 = vunpack.c.l.b16 %v89
    %v199 = vunpack.c.h.b16 %v89
    %v200 = vunpack.c.l.b16 %v90
    %v201 = vunpack.c.h.b16 %v90
    %v202 = vunpack.c.l.b16 %v91
    %v203 = vunpack.c.h.b16 %v91
    %v204 = vunpack.c.l.b16 %v92
    %v205 = vunpack.c.h.b16 %v92
    %v206 = vunpack.c.l.b16 %v93
    %v207 = vunpack.c.h.b16 %v93
    %v208 = vunpack.c.l.b16 %v94
    %v209 = vunpack.c.h.b16 %v94
    %v210 = vunpack.c.l.b16 %v95
    %v211 = vunpack.c.h.b16 %v95
    %v212 = vunpack.c.l.b16 %v96
    %v213 = vunpack.c.h.b16 %v96
    %v214 = vunpack.c.l.b16 %v97
    %v215 = vunpack.c.h.b16 %v97
    %v216 = vunpack.c.l.b16 %v98
    %v217 = vunpack.c.h.b16 %v98
    %v218 = vpack.c.b16 %v162, %v154
    %v219 = vpack.c.b16 %v163, %v155
    %v220 = vpack.c.b16 %v164, %v156
    %v221 = vpack.c.b16 %v165, %v157
    %v222 = vpack.c.b16 %v166, %v158
    %v223 = vpack.c.b16 %v167, %v159
    %v224 = vpack.c.b16 %v168, %v160
    %v225 = vpack.c.b16 %v169, %v161
    %v226 = vpack.c.b16 %v178, %v170
    %v227 = vpack.c.b16 %v179, %v171
    %v228 = vpack.c.b16 %v180, %v172
    %v229 = vpack.c.b16 %v181, %v173
    %v230 = vpack.c.b16 %v182, %v174
    %v231 = vpack.c.b16 %v183, %v175
    %v232 = vpack.c.b16 %v184, %v176
    %v233 = vpack.c.b16 %v185, %v177
    %v234 = vpack.c.b16 %v194, %v186
    %v235 = vpack.c.b16 %v195, %v187
    %v236 = vpack.c.b16 %v196, %v188
    %v237 = vpack.c.b16 %v197, %v189
    %v238 = vpack.c.b16 %v198, %v190
    %v239 = vpack.c.b16 %v199, %v191
    %v240 = vpack.c.b16 %v200, %v192
    %v241 = vpack.c.b16 %v201, %v193
    %v242 = vpack.c.b16 %v210, %v202
    %v243 = vpack.c.b16 %v211, %v203
    %v244 = vpack.c.b16 %v212, %v204
    %v245 = vpack.c.b16 %v213, %v205
    %v246 = vpack.c.b16 %v214, %v206
    %v247 = vpack.c.b16 %v215, %v207
    %v248 = vpack.c.b16 %v216, %v208
    %v249 = vpack.c.b16 %v217, %v209
    %vm282 = vcmask 523264
    %v284 = vsel %vm282, %v121, 0
    %286 = vmatpush.bf16.msra.mxu0 0
    %287 = vmatpush.bf16.msra.mxu0 0
    %288 = vmatpush.bf16.msra.mxu0 0
    %289 = vmatpush.bf16.msra.mxu0 0
    %290 = vmatpush.bf16.msra.mxu0 %v242
    %291 = vmatpush.bf16.msra.mxu0 %v234
    %292 = vmatpush.bf16.msra.mxu0 %v226
    %293 = vmatpush.bf16.msra.mxu0 %v218
    %294 = vmatmul.bf16.gmra.mxu0 %v284
    %v295 = vpop.f32.mrf.mxu0
    %v296 = vadd.f32 %v101, %v295
    %v297 = vpop.f32.mrf.mxu0
    %v298 = vadd.f32 %v101, %v297
    %299 = vdwg.mxu0
    %300 = vmatpush.bf16.msra.mxu0 0
    %301 = vmatpush.bf16.msra.mxu0 0
    %302 = vmatpush.bf16.msra.mxu0 0
    %303 = vmatpush.bf16.msra.mxu0 0
    %304 = vmatpush.bf16.msra.mxu0 %v243
    %305 = vmatpush.bf16.msra.mxu0 %v235
    %306 = vmatpush.bf16.msra.mxu0 %v227
    %307 = vmatpush.bf16.msra.mxu0 %v219
    %308 = vmatmul.bf16.gmra.mxu0 %v284
    %v309 = vpop.f32.mrf.mxu0
    %v310 = vadd.f32 %v102, %v309
    %v311 = vpop.f32.mrf.mxu0
    %v312 = vadd.f32 %v102, %v311
    %313 = vdwg.mxu0
    %314 = vmatpush.bf16.msra.mxu0 0
    %315 = vmatpush.bf16.msra.mxu0 0
    %316 = vmatpush.bf16.msra.mxu0 0
    %317 = vmatpush.bf16.msra.mxu0 0
    %318 = vmatpush.bf16.msra.mxu0 %v244
    %319 = vmatpush.bf16.msra.mxu0 %v236
    %320 = vmatpush.bf16.msra.mxu0 %v228
    %321 = vmatpush.bf16.msra.mxu0 %v220
    %322 = vmatmul.bf16.gmra.mxu0 %v284
    %v323 = vpop.f32.mrf.mxu0
    %v324 = vadd.f32 %v103, %v323
    %v325 = vpop.f32.mrf.mxu0
    %v326 = vadd.f32 %v103, %v325
    %327 = vdwg.mxu0
    %328 = vmatpush.bf16.msra.mxu0 0
    %329 = vmatpush.bf16.msra.mxu0 0
    %330 = vmatpush.bf16.msra.mxu0 0
    %331 = vmatpush.bf16.msra.mxu0 0
    %332 = vmatpush.bf16.msra.mxu0 %v245
    %333 = vmatpush.bf16.msra.mxu0 %v237
    %334 = vmatpush.bf16.msra.mxu0 %v229
    %335 = vmatpush.bf16.msra.mxu0 %v221
    %336 = vmatmul.bf16.gmra.mxu0 %v284
    %v337 = vpop.f32.mrf.mxu0
    %v338 = vadd.f32 %v104, %v337
    %v339 = vpop.f32.mrf.mxu0
    %v340 = vadd.f32 %v104, %v339
    %341 = vdwg.mxu0
    %342 = vmatpush.bf16.msra.mxu0 0
    %343 = vmatpush.bf16.msra.mxu0 0
    %344 = vmatpush.bf16.msra.mxu0 0
    %345 = vmatpush.bf16.msra.mxu0 0
    %346 = vmatpush.bf16.msra.mxu0 %v246
    %347 = vmatpush.bf16.msra.mxu0 %v238
    %348 = vmatpush.bf16.msra.mxu0 %v230
    %349 = vmatpush.bf16.msra.mxu0 %v222
    %350 = vmatmul.bf16.gmra.mxu0 %v284
    %v351 = vpop.f32.mrf.mxu0
    %v352 = vadd.f32 %v105, %v351
    %v353 = vpop.f32.mrf.mxu0
    %v354 = vadd.f32 %v105, %v353
    %355 = vdwg.mxu0
    %356 = vmatpush.bf16.msra.mxu0 0
    %357 = vmatpush.bf16.msra.mxu0 0
    %358 = vmatpush.bf16.msra.mxu0 0
    %359 = vmatpush.bf16.msra.mxu0 0
    %360 = vmatpush.bf16.msra.mxu0 %v247
    %361 = vmatpush.bf16.msra.mxu0 %v239
    %362 = vmatpush.bf16.msra.mxu0 %v231
    %363 = vmatpush.bf16.msra.mxu0 %v223
    %364 = vmatmul.bf16.gmra.mxu0 %v284
    %v365 = vpop.f32.mrf.mxu0
    %v366 = vadd.f32 %v106, %v365
    %v367 = vpop.f32.mrf.mxu0
    %v368 = vadd.f32 %v106, %v367
    %369 = vdwg.mxu0
    %370 = vmatpush.bf16.msra.mxu0 0
    %371 = vmatpush.bf16.msra.mxu0 0
    %372 = vmatpush.bf16.msra.mxu0 0
    %373 = vmatpush.bf16.msra.mxu0 0
    %374 = vmatpush.bf16.msra.mxu0 %v248
    %375 = vmatpush.bf16.msra.mxu0 %v240
    %376 = vmatpush.bf16.msra.mxu0 %v232
    %377 = vmatpush.bf16.msra.mxu0 %v224
    %378 = vmatmul.bf16.gmra.mxu0 %v284
    %v379 = vpop.f32.mrf.mxu0
    %v380 = vadd.f32 %v107, %v379
    %v381 = vpop.f32.mrf.mxu0
    %v382 = vadd.f32 %v107, %v381
    %383 = vdwg.mxu0
    %384 = vmatpush.bf16.msra.mxu0 0
    %385 = vmatpush.bf16.msra.mxu0 0
    %386 = vmatpush.bf16.msra.mxu0 0
    %387 = vmatpush.bf16.msra.mxu0 0
    %388 = vmatpush.bf16.msra.mxu0 %v249
    %389 = vmatpush.bf16.msra.mxu0 %v241
    %390 = vmatpush.bf16.msra.mxu0 %v233
    %391 = vmatpush.bf16.msra.mxu0 %v225
    %392 = vmatmul.bf16.gmra.mxu0 %v284
    %v393 = vpop.f32.mrf.mxu0
    %v394 = vadd.f32 %v108, %v393
    %v395 = vpop.f32.mrf.mxu0
    %v396 = vadd.f32 %v108, %v395
    %397 = vdwg.mxu0
    %v398 = vmul.f32 %v296, 0.01
    %v399 = vmul.f32 %v310, 0.01
    %v400 = vmul.f32 %v324, 0.01
    %v401 = vmul.f32 %v338, 0.01
    %v402 = vmul.f32 %v352, 0.01
    %v403 = vmul.f32 %v366, 0.01
    %v404 = vmul.f32 %v380, 0.01
    %v405 = vmul.f32 %v394, 0.01
    %v406 = vmul.f32 %v298, 0.01
    %v407 = vmul.f32 %v312, 0.01
    %v408 = vmul.f32 %v326, 0.01
    %v409 = vmul.f32 %v340, 0.01
    %v410 = vmul.f32 %v354, 0.01
    %v411 = vmul.f32 %v368, 0.01
    %v412 = vmul.f32 %v382, 0.01
    %v413 = vmul.f32 %v396, 0.01
    %v414 = vmax.f32 %v296, %v398
    %v415 = vmax.f32 %v310, %v399
    %v416 = vmax.f32 %v324, %v400
    %v417 = vmax.f32 %v338, %v401
    %v418 = vmax.f32 %v352, %v402
    %v419 = vmax.f32 %v366, %v403
    %v420 = vmax.f32 %v380, %v404
    %v421 = vmax.f32 %v394, %v405
    %v422 = vmax.f32 %v298, %v406
    %v423 = vmax.f32 %v312, %v407
    %v424 = vmax.f32 %v326, %v408
    %v425 = vmax.f32 %v340, %v409
    %v426 = vmax.f32 %v354, %v410
    %v427 = vmax.f32 %v368, %v411
    %v428 = vmax.f32 %v382, %v412
    %v429 = vmax.f32 %v396, %v413
    %v430 = vpack.c.bf16 %v422, %v414
    %v431 = vpack.c.bf16 %v423, %v415
    %v432 = vpack.c.bf16 %v424, %v416
    %v433 = vpack.c.bf16 %v425, %v417
    %v434 = vpack.c.bf16 %v426, %v418
    %v435 = vpack.c.bf16 %v427, %v419
    %v436 = vpack.c.bf16 %v428, %v420
    %v437 = vpack.c.bf16 %v429, %v421
    %v438 = vld [vmem:[#allocation4] sm:$0xff]
    %v439 = vld [vmem:[#allocation4 + $0x8] sm:$0xff]
    %v440 = vld [vmem:[#allocation4 + $0x10] sm:$0xff]
    %v441 = vld [vmem:[#allocation4 + $0x18] sm:$0xff]
    %v442 = vld [vmem:[#allocation4 + $0x20] sm:$0xff]
    %v443 = vld [vmem:[#allocation4 + $0x28] sm:$0xff]
    %v444 = vld [vmem:[#allocation4 + $0x30] sm:$0xff]
    %v445 = vld [vmem:[#allocation4 + $0x38] sm:$0xff]
    %v446 = vld [vmem:[#allocation4 + $0x40] sm:$0xff]
    %v447 = vld [vmem:[#allocation4 + $0x48] sm:$0xff]
    %v448 = vld [vmem:[#allocation4 + $0x50] sm:$0xff]
    %v449 = vld [vmem:[#allocation4 + $0x58] sm:$0xff]
    %v450 = vld [vmem:[#allocation4 + $0x60] sm:$0xff]
    %v451 = vld [vmem:[#allocation4 + $0x68] sm:$0xff]
    %v452 = vld [vmem:[#allocation4 + $0x70] sm:$0xff]
    %v453 = vld [vmem:[#allocation4 + $0x78] sm:$0xff]
    %v454 = vld [vmem:[#allocation4 + $0x80] sm:$0xff]
    %v455 = vld [vmem:[#allocation4 + $0x88] sm:$0xff]
    %v456 = vld [vmem:[#allocation4 + $0x90] sm:$0xff]
    %v457 = vld [vmem:[#allocation4 + $0x98] sm:$0xff]
    %v458 = vld [vmem:[#allocation4 + $0xa0] sm:$0xff]
    %v459 = vld [vmem:[#allocation4 + $0xa8] sm:$0xff]
    %v460 = vld [vmem:[#allocation4 + $0xb0] sm:$0xff]
    %v461 = vld [vmem:[#allocation4 + $0xb8] sm:$0xff]
    %v462 = vld [vmem:[#allocation4 + $0xc0] sm:$0xff]
    %v463 = vld [vmem:[#allocation4 + $0xc8] sm:$0xff]
    %v464 = vld [vmem:[#allocation4 + $0xd0] sm:$0xff]
    %v465 = vld [vmem:[#allocation4 + $0xd8] sm:$0xff]
    %v466 = vld [vmem:[#allocation4 + $0xe0] sm:$0xff]
    %v467 = vld [vmem:[#allocation4 + $0xe8] sm:$0xff]
    %v468 = vld [vmem:[#allocation4 + $0xf0] sm:$0xff]
    %v469 = vld [vmem:[#allocation4 + $0xf8] sm:$0xff]
    %v470 = vld [vmem:[#allocation4 + $0x100] sm:$0xff]
    %v471 = vld [vmem:[#allocation4 + $0x108] sm:$0xff]
    %v472 = vld [vmem:[#allocation4 + $0x110] sm:$0xff]
    %v473 = vld [vmem:[#allocation4 + $0x118] sm:$0xff]
    %v474 = vld [vmem:[#allocation4 + $0x120] sm:$0xff]
    %v475 = vld [vmem:[#allocation4 + $0x128] sm:$0xff]
    %v476 = vld [vmem:[#allocation4 + $0x130] sm:$0xff]
    %v477 = vld [vmem:[#allocation4 + $0x138] sm:$0xff]
    %v478 = vld [vmem:[#allocation4 + $0x140] sm:$0xff]
    %v479 = vld [vmem:[#allocation4 + $0x148] sm:$0xff]
    %v480 = vld [vmem:[#allocation4 + $0x150] sm:$0xff]
    %v481 = vld [vmem:[#allocation4 + $0x158] sm:$0xff]
    %v482 = vld [vmem:[#allocation4 + $0x160] sm:$0xff]
    %v483 = vld [vmem:[#allocation4 + $0x168] sm:$0xff]
    %v484 = vld [vmem:[#allocation4 + $0x170] sm:$0xff]
    %v485 = vld [vmem:[#allocation4 + $0x178] sm:$0xff]
    %v486 = vld [vmem:[#allocation4 + $0x180] sm:$0xff]
    %v487 = vld [vmem:[#allocation4 + $0x188] sm:$0xff]
    %v488 = vld [vmem:[#allocation4 + $0x190] sm:$0xff]
    %v489 = vld [vmem:[#allocation4 + $0x198] sm:$0xff]
    %v490 = vld [vmem:[#allocation4 + $0x1a0] sm:$0xff]
    %v491 = vld [vmem:[#allocation4 + $0x1a8] sm:$0xff]
    %v492 = vld [vmem:[#allocation4 + $0x1b0] sm:$0xff]
    %v493 = vld [vmem:[#allocation4 + $0x1b8] sm:$0xff]
    %v494 = vld [vmem:[#allocation4 + $0x1c0] sm:$0xff]
    %v495 = vld [vmem:[#allocation4 + $0x1c8] sm:$0xff]
    %v496 = vld [vmem:[#allocation4 + $0x1d0] sm:$0xff]
    %v497 = vld [vmem:[#allocation4 + $0x1d8] sm:$0xff]
    %v498 = vld [vmem:[#allocation4 + $0x1e0] sm:$0xff]
    %v499 = vld [vmem:[#allocation4 + $0x1e8] sm:$0xff]
    %v500 = vld [vmem:[#allocation4 + $0x1f0] sm:$0xff]
    %v501 = vld [vmem:[#allocation4 + $0x1f8] sm:$0xff]
    %v502 = vld [vmem:[#allocation4 + $0x200] sm:$0xff]
    %v503 = vld [vmem:[#allocation4 + $0x208] sm:$0xff]
    %v504 = vld [vmem:[#allocation4 + $0x210] sm:$0xff]
    %v505 = vld [vmem:[#allocation4 + $0x218] sm:$0xff]
    %v506 = vld [vmem:[#allocation4 + $0x220] sm:$0xff]
    %v507 = vld [vmem:[#allocation4 + $0x228] sm:$0xff]
    %v508 = vld [vmem:[#allocation4 + $0x230] sm:$0xff]
    %v509 = vld [vmem:[#allocation4 + $0x238] sm:$0xff]
    %v510 = vld [vmem:[#allocation4 + $0x240] sm:$0xff]
    %v511 = vld [vmem:[#allocation4 + $0x248] sm:$0xff]
    %v512 = vld [vmem:[#allocation4 + $0x250] sm:$0xff]
    %v513 = vld [vmem:[#allocation4 + $0x258] sm:$0xff]
    %v514 = vld [vmem:[#allocation4 + $0x260] sm:$0xff]
    %v515 = vld [vmem:[#allocation4 + $0x268] sm:$0xff]
    %v516 = vld [vmem:[#allocation4 + $0x270] sm:$0xff]
    %v517 = vld [vmem:[#allocation4 + $0x278] sm:$0xff]
    %v518 = vld [vmem:[#allocation4 + $0x280] sm:$0xff]
    %v519 = vld [vmem:[#allocation4 + $0x288] sm:$0xff]
    %v520 = vld [vmem:[#allocation4 + $0x290] sm:$0xff]
    %v521 = vld [vmem:[#allocation4 + $0x298] sm:$0xff]
    %v522 = vld [vmem:[#allocation4 + $0x2a0] sm:$0xff]
    %v523 = vld [vmem:[#allocation4 + $0x2a8] sm:$0xff]
    %v524 = vld [vmem:[#allocation4 + $0x2b0] sm:$0xff]
    %v525 = vld [vmem:[#allocation4 + $0x2b8] sm:$0xff]
    %v526 = vld [vmem:[#allocation4 + $0x2c0] sm:$0xff]
    %v527 = vld [vmem:[#allocation4 + $0x2c8] sm:$0xff]
    %v528 = vld [vmem:[#allocation4 + $0x2d0] sm:$0xff]
    %v529 = vld [vmem:[#allocation4 + $0x2d8] sm:$0xff]
    %v530 = vld [vmem:[#allocation4 + $0x2e0] sm:$0xff]
    %v531 = vld [vmem:[#allocation4 + $0x2e8] sm:$0xff]
    %v532 = vld [vmem:[#allocation4 + $0x2f0] sm:$0xff]
    %v533 = vld [vmem:[#allocation4 + $0x2f8] sm:$0xff]
    %v534 = vld [vmem:[#allocation4 + $0x300] sm:$0xff]
    %v535 = vld [vmem:[#allocation4 + $0x308] sm:$0xff]
    %v536 = vld [vmem:[#allocation4 + $0x310] sm:$0xff]
    %v537 = vld [vmem:[#allocation4 + $0x318] sm:$0xff]
    %v538 = vld [vmem:[#allocation4 + $0x320] sm:$0xff]
    %v539 = vld [vmem:[#allocation4 + $0x328] sm:$0xff]
    %v540 = vld [vmem:[#allocation4 + $0x330] sm:$0xff]
    %v541 = vld [vmem:[#allocation4 + $0x338] sm:$0xff]
    %v542 = vld [vmem:[#allocation4 + $0x340] sm:$0xff]
    %v543 = vld [vmem:[#allocation4 + $0x348] sm:$0xff]
    %v544 = vld [vmem:[#allocation4 + $0x350] sm:$0xff]
    %v545 = vld [vmem:[#allocation4 + $0x358] sm:$0xff]
    %v546 = vld [vmem:[#allocation4 + $0x360] sm:$0xff]
    %v547 = vld [vmem:[#allocation4 + $0x368] sm:$0xff]
    %v548 = vld [vmem:[#allocation4 + $0x370] sm:$0xff]
    %v549 = vld [vmem:[#allocation4 + $0x378] sm:$0xff]
    %v550 = vld [vmem:[#allocation4 + $0x380] sm:$0xff]
    %v551 = vld [vmem:[#allocation4 + $0x388] sm:$0xff]
    %v552 = vld [vmem:[#allocation4 + $0x390] sm:$0xff]
    %v553 = vld [vmem:[#allocation4 + $0x398] sm:$0xff]
    %v554 = vld [vmem:[#allocation4 + $0x3a0] sm:$0xff]
    %v555 = vld [vmem:[#allocation4 + $0x3a8] sm:$0xff]
    %v556 = vld [vmem:[#allocation4 + $0x3b0] sm:$0xff]
    %v557 = vld [vmem:[#allocation4 + $0x3b8] sm:$0xff]
    %v558 = vld [vmem:[#allocation4 + $0x3c0] sm:$0xff]
    %v559 = vld [vmem:[#allocation4 + $0x3c8] sm:$0xff]
    %v560 = vld [vmem:[#allocation4 + $0x3d0] sm:$0xff]
    %v561 = vld [vmem:[#allocation4 + $0x3d8] sm:$0xff]
    %v562 = vld [vmem:[#allocation4 + $0x3e0] sm:$0xff]
    %v563 = vld [vmem:[#allocation4 + $0x3e8] sm:$0xff]
    %v564 = vld [vmem:[#allocation4 + $0x3f0] sm:$0xff]
    %v565 = vld [vmem:[#allocation4 + $0x3f8] sm:$0xff]
    %v566 = vld [vmem:[%s4] sm:$0x3]
    %v568 = vperm.slane %v566, 0
    %v569 = vperm.slane %v566, 1
    %v700 = vunpack.c.l.b16 %v438
    %v701 = vunpack.c.h.b16 %v438
    %v702 = vunpack.c.l.b16 %v439
    %v703 = vunpack.c.h.b16 %v439
    %v704 = vunpack.c.l.b16 %v440
    %v705 = vunpack.c.h.b16 %v440
    %v706 = vunpack.c.l.b16 %v441
    %v707 = vunpack.c.h.b16 %v441
    %v708 = vunpack.c.l.b16 %v442
    %v709 = vunpack.c.h.b16 %v442
    %v710 = vunpack.c.l.b16 %v443
    %v711 = vunpack.c.h.b16 %v443
    %v712 = vunpack.c.l.b16 %v444
    %v713 = vunpack.c.h.b16 %v444
    %v714 = vunpack.c.l.b16 %v445
    %v715 = vunpack.c.h.b16 %v445
    %v716 = vunpack.c.l.b16 %v446
    %v717 = vunpack.c.h.b16 %v446
    %v718 = vunpack.c.l.b16 %v447
    %v719 = vunpack.c.h.b16 %v447
    %v720 = vunpack.c.l.b16 %v448
    %v721 = vunpack.c.h.b16 %v448
    %v722 = vunpack.c.l.b16 %v449
    %v723 = vunpack.c.h.b16 %v449
    %v724 = vunpack.c.l.b16 %v450
    %v725 = vunpack.c.h.b16 %v450
    %v726 = vunpack.c.l.b16 %v451
    %v727 = vunpack.c.h.b16 %v451
    %v728 = vunpack.c.l.b16 %v452
    %v729 = vunpack.c.h.b16 %v452
    %v730 = vunpack.c.l.b16 %v453
    %v731 = vunpack.c.h.b16 %v453
    %v732 = vunpack.c.l.b16 %v454
    %v733 = vunpack.c.h.b16 %v454
    %v734 = vunpack.c.l.b16 %v455
    %v735 = vunpack.c.h.b16 %v455
    %v736 = vunpack.c.l.b16 %v456
    %v737 = vunpack.c.h.b16 %v456
    %v738 = vunpack.c.l.b16 %v457
    %v739 = vunpack.c.h.b16 %v457
    %v740 = vunpack.c.l.b16 %v458
    %v741 = vunpack.c.h.b16 %v458
    %v742 = vunpack.c.l.b16 %v459
    %v743 = vunpack.c.h.b16 %v459
    %v744 = vunpack.c.l.b16 %v460
    %v745 = vunpack.c.h.b16 %v460
    %v746 = vunpack.c.l.b16 %v461
    %v747 = vunpack.c.h.b16 %v461
    %v748 = vunpack.c.l.b16 %v462
    %v749 = vunpack.c.h.b16 %v462
    %v750 = vunpack.c.l.b16 %v463
    %v751 = vunpack.c.h.b16 %v463
    %v752 = vunpack.c.l.b16 %v464
    %v753 = vunpack.c.h.b16 %v464
    %v754 = vunpack.c.l.b16 %v465
    %v755 = vunpack.c.h.b16 %v465
    %v756 = vunpack.c.l.b16 %v466
    %v757 = vunpack.c.h.b16 %v466
    %v758 = vunpack.c.l.b16 %v467
    %v759 = vunpack.c.h.b16 %v467
    %v760 = vunpack.c.l.b16 %v468
    %v761 = vunpack.c.h.b16 %v468
    %v762 = vunpack.c.l.b16 %v469
    %v763 = vunpack.c.h.b16 %v469
    %v764 = vunpack.c.l.b16 %v470
    %v765 = vunpack.c.h.b16 %v470
    %v766 = vunpack.c.l.b16 %v471
    %v767 = vunpack.c.h.b16 %v471
    %v768 = vunpack.c.l.b16 %v472
    %v769 = vunpack.c.h.b16 %v472
    %v770 = vunpack.c.l.b16 %v473
    %v771 = vunpack.c.h.b16 %v473
    %v772 = vunpack.c.l.b16 %v474
    %v773 = vunpack.c.h.b16 %v474
    %v774 = vunpack.c.l.b16 %v475
    %v775 = vunpack.c.h.b16 %v475
    %v776 = vunpack.c.l.b16 %v476
    %v777 = vunpack.c.h.b16 %v476
    %v778 = vunpack.c.l.b16 %v477
    %v779 = vunpack.c.h.b16 %v477
    %v780 = vunpack.c.l.b16 %v478
    %v781 = vunpack.c.h.b16 %v478
    %v782 = vunpack.c.l.b16 %v479
    %v783 = vunpack.c.h.b16 %v479
    %v784 = vunpack.c.l.b16 %v480
    %v785 = vunpack.c.h.b16 %v480
    %v786 = vunpack.c.l.b16 %v481
    %v787 = vunpack.c.h.b16 %v481
    %v788 = vunpack.c.l.b16 %v482
    %v789 = vunpack.c.h.b16 %v482
    %v790 = vunpack.c.l.b16 %v483
    %v791 = vunpack.c.h.b16 %v483
    %v792 = vunpack.c.l.b16 %v484
    %v793 = vunpack.c.h.b16 %v484
    %v794 = vunpack.c.l.b16 %v485
    %v795 = vunpack.c.h.b16 %v485
    %v796 = vunpack.c.l.b16 %v486
    %v797 = vunpack.c.h.b16 %v486
    %v798 = vunpack.c.l.b16 %v487
    %v799 = vunpack.c.h.b16 %v487
    %v800 = vunpack.c.l.b16 %v488
    %v801 = vunpack.c.h.b16 %v488
    %v802 = vunpack.c.l.b16 %v489
    %v803 = vunpack.c.h.b16 %v489
    %v804 = vunpack.c.l.b16 %v490
    %v805 = vunpack.c.h.b16 %v490
    %v806 = vunpack.c.l.b16 %v491
    %v807 = vunpack.c.h.b16 %v491
    %v808 = vunpack.c.l.b16 %v492
    %v809 = vunpack.c.h.b16 %v492
    %v810 = vunpack.c.l.b16 %v493
    %v811 = vunpack.c.h.b16 %v493
    %v812 = vunpack.c.l.b16 %v494
    %v813 = vunpack.c.h.b16 %v494
    %v814 = vunpack.c.l.b16 %v495
    %v815 = vunpack.c.h.b16 %v495
    %v816 = vunpack.c.l.b16 %v496
    %v817 = vunpack.c.h.b16 %v496
    %v818 = vunpack.c.l.b16 %v497
    %v819 = vunpack.c.h.b16 %v497
    %v820 = vunpack.c.l.b16 %v498
    %v821 = vunpack.c.h.b16 %v498
    %v822 = vunpack.c.l.b16 %v499
    %v823 = vunpack.c.h.b16 %v499
    %v824 = vunpack.c.l.b16 %v500
    %v825 = vunpack.c.h.b16 %v500
    %v826 = vunpack.c.l.b16 %v501
    %v827 = vunpack.c.h.b16 %v501
    %v828 = vunpack.c.l.b16 %v502
    %v829 = vunpack.c.h.b16 %v502
    %v830 = vunpack.c.l.b16 %v503
    %v831 = vunpack.c.h.b16 %v503
    %v832 = vunpack.c.l.b16 %v504
    %v833 = vunpack.c.h.b16 %v504
    %v834 = vunpack.c.l.b16 %v505
    %v835 = vunpack.c.h.b16 %v505
    %v836 = vunpack.c.l.b16 %v506
    %v837 = vunpack.c.h.b16 %v506
    %v838 = vunpack.c.l.b16 %v507
    %v839 = vunpack.c.h.b16 %v507
    %v840 = vunpack.c.l.b16 %v508
    %v841 = vunpack.c.h.b16 %v508
    %v842 = vunpack.c.l.b16 %v509
    %v843 = vunpack.c.h.b16 %v509
    %v844 = vunpack.c.l.b16 %v510
    %v845 = vunpack.c.h.b16 %v510
    %v846 = vunpack.c.l.b16 %v511
    %v847 = vunpack.c.h.b16 %v511
    %v848 = vunpack.c.l.b16 %v512
    %v849 = vunpack.c.h.b16 %v512
    %v850 = vunpack.c.l.b16 %v513
    %v851 = vunpack.c.h.b16 %v513
    %v852 = vunpack.c.l.b16 %v514
    %v853 = vunpack.c.h.b16 %v514
    %v854 = vunpack.c.l.b16 %v515
    %v855 = vunpack.c.h.b16 %v515
    %v856 = vunpack.c.l.b16 %v516
    %v857 = vunpack.c.h.b16 %v516
    %v858 = vunpack.c.l.b16 %v517
    %v859 = vunpack.c.h.b16 %v517
    %v860 = vunpack.c.l.b16 %v518
    %v861 = vunpack.c.h.b16 %v518
    %v862 = vunpack.c.l.b16 %v519
    %v863 = vunpack.c.h.b16 %v519
    %v864 = vunpack.c.l.b16 %v520
    %v865 = vunpack.c.h.b16 %v520
    %v866 = vunpack.c.l.b16 %v521
    %v867 = vunpack.c.h.b16 %v521
    %v868 = vunpack.c.l.b16 %v522
    %v869 = vunpack.c.h.b16 %v522
    %v870 = vunpack.c.l.b16 %v523
    %v871 = vunpack.c.h.b16 %v523
    %v872 = vunpack.c.l.b16 %v524
    %v873 = vunpack.c.h.b16 %v524
    %v874 = vunpack.c.l.b16 %v525
    %v875 = vunpack.c.h.b16 %v525
    %v876 = vunpack.c.l.b16 %v526
    %v877 = vunpack.c.h.b16 %v526
    %v878 = vunpack.c.l.b16 %v527
    %v879 = vunpack.c.h.b16 %v527
    %v880 = vunpack.c.l.b16 %v528
    %v881 = vunpack.c.h.b16 %v528
    %v882 = vunpack.c.l.b16 %v529
    %v883 = vunpack.c.h.b16 %v529
    %v884 = vunpack.c.l.b16 %v530
    %v885 = vunpack.c.h.b16 %v530
    %v886 = vunpack.c.l.b16 %v531
    %v887 = vunpack.c.h.b16 %v531
    %v888 = vunpack.c.l.b16 %v532
    %v889 = vunpack.c.h.b16 %v532
    %v890 = vunpack.c.l.b16 %v533
    %v891 = vunpack.c.h.b16 %v533
    %v892 = vunpack.c.l.b16 %v534
    %v893 = vunpack.c.h.b16 %v534
    %v894 = vunpack.c.l.b16 %v535
    %v895 = vunpack.c.h.b16 %v535
    %v896 = vunpack.c.l.b16 %v536
    %v897 = vunpack.c.h.b16 %v536
    %v898 = vunpack.c.l.b16 %v537
    %v899 = vunpack.c.h.b16 %v537
    %v900 = vunpack.c.l.b16 %v538
    %v901 = vunpack.c.h.b16 %v538
    %v902 = vunpack.c.l.b16 %v539
    %v903 = vunpack.c.h.b16 %v539
    %v904 = vunpack.c.l.b16 %v540
    %v905 = vunpack.c.h.b16 %v540
    %v906 = vunpack.c.l.b16 %v541
    %v907 = vunpack.c.h.b16 %v541
    %v908 = vunpack.c.l.b16 %v542
    %v909 = vunpack.c.h.b16 %v542
    %v910 = vunpack.c.l.b16 %v543
    %v911 = vunpack.c.h.b16 %v543
    %v912 = vunpack.c.l.b16 %v544
    %v913 = vunpack.c.h.b16 %v544
    %v914 = vunpack.c.l.b16 %v545
    %v915 = vunpack.c.h.b16 %v545
    %v916 = vunpack.c.l.b16 %v546
    %v917 = vunpack.c.h.b16 %v546
    %v918 = vunpack.c.l.b16 %v547
    %v919 = vunpack.c.h.b16 %v547
    %v920 = vunpack.c.l.b16 %v548
    %v921 = vunpack.c.h.b16 %v548
    %v922 = vunpack.c.l.b16 %v549
    %v923 = vunpack.c.h.b16 %v549
    %v924 = vunpack.c.l.b16 %v550
    %v925 = vunpack.c.h.b16 %v550
    %v926 = vunpack.c.l.b16 %v551
    %v927 = vunpack.c.h.b16 %v551
    %v928 = vunpack.c.l.b16 %v552
    %v929 = vunpack.c.h.b16 %v552
    %v930 = vunpack.c.l.b16 %v553
    %v931 = vunpack.c.h.b16 %v553
    %v932 = vunpack.c.l.b16 %v554
    %v933 = vunpack.c.h.b16 %v554
    %v934 = vunpack.c.l.b16 %v555
    %v935 = vunpack.c.h.b16 %v555
    %v936 = vunpack.c.l.b16 %v556
    %v937 = vunpack.c.h.b16 %v556
    %v938 = vunpack.c.l.b16 %v557
    %v939 = vunpack.c.h.b16 %v557
    %v940 = vunpack.c.l.b16 %v558
    %v941 = vunpack.c.h.b16 %v558
    %v942 = vunpack.c.l.b16 %v559
    %v943 = vunpack.c.h.b16 %v559
    %v944 = vunpack.c.l.b16 %v560
    %v945 = vunpack.c.h.b16 %v560
    %v946 = vunpack.c.l.b16 %v561
    %v947 = vunpack.c.h.b16 %v561
    %v948 = vunpack.c.l.b16 %v562
    %v949 = vunpack.c.h.b16 %v562
    %v950 = vunpack.c.l.b16 %v563
    %v951 = vunpack.c.h.b16 %v563
    %v952 = vunpack.c.l.b16 %v564
    %v953 = vunpack.c.h.b16 %v564
    %v954 = vunpack.c.l.b16 %v565
    %v955 = vunpack.c.h.b16 %v565
    %v956 = vpack.c.b16 %v702, %v700
    %v957 = vpack.c.b16 %v703, %v701
    %v958 = vpack.c.b16 %v706, %v704
    %v959 = vpack.c.b16 %v707, %v705
    %v960 = vpack.c.b16 %v710, %v708
    %v961 = vpack.c.b16 %v711, %v709
    %v962 = vpack.c.b16 %v714, %v712
    %v963 = vpack.c.b16 %v715, %v713
    %v964 = vpack.c.b16 %v718, %v716
    %v965 = vpack.c.b16 %v719, %v717
    %v966 = vpack.c.b16 %v722, %v720
    %v967 = vpack.c.b16 %v723, %v721
    %v968 = vpack.c.b16 %v726, %v724
    %v969 = vpack.c.b16 %v727, %v725
    %v970 = vpack.c.b16 %v730, %v728
    %v971 = vpack.c.b16 %v731, %v729
    %v972 = vpack.c.b16 %v734, %v732
    %v973 = vpack.c.b16 %v735, %v733
    %v974 = vpack.c.b16 %v738, %v736
    %v975 = vpack.c.b16 %v739, %v737
    %v976 = vpack.c.b16 %v742, %v740
    %v977 = vpack.c.b16 %v743, %v741
    %v978 = vpack.c.b16 %v746, %v744
    %v979 = vpack.c.b16 %v747, %v745
    %v980 = vpack.c.b16 %v750, %v748
    %v981 = vpack.c.b16 %v751, %v749
    %v982 = vpack.c.b16 %v754, %v752
    %v983 = vpack.c.b16 %v755, %v753
    %v984 = vpack.c.b16 %v758, %v756
    %v985 = vpack.c.b16 %v759, %v757
    %v986 = vpack.c.b16 %v762, %v760
    %v987 = vpack.c.b16 %v763, %v761
    %v988 = vpack.c.b16 %v766, %v764
    %v989 = vpack.c.b16 %v767, %v765
    %v990 = vpack.c.b16 %v770, %v768
    %v991 = vpack.c.b16 %v771, %v769
    %v992 = vpack.c.b16 %v774, %v772
    %v993 = vpack.c.b16 %v775, %v773
    %v994 = vpack.c.b16 %v778, %v776
    %v995 = vpack.c.b16 %v779, %v777
    %v996 = vpack.c.b16 %v782, %v780
    %v997 = vpack.c.b16 %v783, %v781
    %v998 = vpack.c.b16 %v786, %v784
    %v999 = vpack.c.b16 %v787, %v785
    %v1000 = vpack.c.b16 %v790, %v788
    %v1001 = vpack.c.b16 %v791, %v789
    %v1002 = vpack.c.b16 %v794, %v792
    %v1003 = vpack.c.b16 %v795, %v793
    %v1004 = vpack.c.b16 %v798, %v796
    %v1005 = vpack.c.b16 %v799, %v797
    %v1006 = vpack.c.b16 %v802, %v800
    %v1007 = vpack.c.b16 %v803, %v801
    %v1008 = vpack.c.b16 %v806, %v804
    %v1009 = vpack.c.b16 %v807, %v805
    %v1010 = vpack.c.b16 %v810, %v808
    %v1011 = vpack.c.b16 %v811, %v809
    %v1012 = vpack.c.b16 %v814, %v812
    %v1013 = vpack.c.b16 %v815, %v813
    %v1014 = vpack.c.b16 %v818, %v816
    %v1015 = vpack.c.b16 %v819, %v817
    %v1016 = vpack.c.b16 %v822, %v820
    %v1017 = vpack.c.b16 %v823, %v821
    %v1018 = vpack.c.b16 %v826, %v824
    %v1019 = vpack.c.b16 %v827, %v825
    %v1020 = vpack.c.b16 %v830, %v828
    %v1021 = vpack.c.b16 %v831, %v829
    %v1022 = vpack.c.b16 %v834, %v832
    %v1023 = vpack.c.b16 %v835, %v833
    %v1024 = vpack.c.b16 %v838, %v836
    %v1025 = vpack.c.b16 %v839, %v837
    %v1026 = vpack.c.b16 %v842, %v840
    %v1027 = vpack.c.b16 %v843, %v841
    %v1028 = vpack.c.b16 %v846, %v844
    %v1029 = vpack.c.b16 %v847, %v845
    %v1030 = vpack.c.b16 %v850, %v848
    %v1031 = vpack.c.b16 %v851, %v849
    %v1032 = vpack.c.b16 %v854, %v852
    %v1033 = vpack.c.b16 %v855, %v853
    %v1034 = vpack.c.b16 %v858, %v856
    %v1035 = vpack.c.b16 %v859, %v857
    %v1036 = vpack.c.b16 %v862, %v860
    %v1037 = vpack.c.b16 %v863, %v861
    %v1038 = vpack.c.b16 %v866, %v864
    %v1039 = vpack.c.b16 %v867, %v865
    %v1040 = vpack.c.b16 %v870, %v868
    %v1041 = vpack.c.b16 %v871, %v869
    %v1042 = vpack.c.b16 %v874, %v872
    %v1043 = vpack.c.b16 %v875, %v873
    %v1044 = vpack.c.b16 %v878, %v876
    %v1045 = vpack.c.b16 %v879, %v877
    %v1046 = vpack.c.b16 %v882, %v880
    %v1047 = vpack.c.b16 %v883, %v881
    %v1048 = vpack.c.b16 %v886, %v884
    %v1049 = vpack.c.b16 %v887, %v885
    %v1050 = vpack.c.b16 %v890, %v888
    %v1051 = vpack.c.b16 %v891, %v889
    %v1052 = vpack.c.b16 %v894, %v892
    %v1053 = vpack.c.b16 %v895, %v893
    %v1054 = vpack.c.b16 %v898, %v896
    %v1055 = vpack.c.b16 %v899, %v897
    %v1056 = vpack.c.b16 %v902, %v900
    %v1057 = vpack.c.b16 %v903, %v901
    %v1058 = vpack.c.b16 %v906, %v904
    %v1059 = vpack.c.b16 %v907, %v905
    %v1060 = vpack.c.b16 %v910, %v908
    %v1061 = vpack.c.b16 %v911, %v909
    %v1062 = vpack.c.b16 %v914, %v912
    %v1063 = vpack.c.b16 %v915, %v913
    %v1064 = vpack.c.b16 %v918, %v916
    %v1065 = vpack.c.b16 %v919, %v917
    %v1066 = vpack.c.b16 %v922, %v920
    %v1067 = vpack.c.b16 %v923, %v921
    %v1068 = vpack.c.b16 %v926, %v924
    %v1069 = vpack.c.b16 %v927, %v925
    %v1070 = vpack.c.b16 %v930, %v928
    %v1071 = vpack.c.b16 %v931, %v929
    %v1072 = vpack.c.b16 %v934, %v932
    %v1073 = vpack.c.b16 %v935, %v933
    %v1074 = vpack.c.b16 %v938, %v936
    %v1075 = vpack.c.b16 %v939, %v937
    %v1076 = vpack.c.b16 %v942, %v940
    %v1077 = vpack.c.b16 %v943, %v941
    %v1078 = vpack.c.b16 %v946, %v944
    %v1079 = vpack.c.b16 %v947, %v945
    %v1080 = vpack.c.b16 %v950, %v948
    %v1081 = vpack.c.b16 %v951, %v949
    %v1082 = vpack.c.b16 %v954, %v952
    %v1083 = vpack.c.b16 %v955, %v953
    %1212 = vmatpush.bf16.msra.mxu0 %v970
    %1213 = vmatpush.bf16.msra.mxu0 %v968
    %1214 = vmatpush.bf16.msra.mxu0 %v966
    %1215 = vmatpush.bf16.msra.mxu0 %v964
    %1216 = vmatpush.bf16.msra.mxu0 %v962
    %1217 = vmatpush.bf16.msra.mxu0 %v960
    %1218 = vmatpush.bf16.msra.mxu0 %v958
    %1219 = vmatpush.bf16.msra.mxu0 %v956
    %1220 = vmatmul.bf16.gmra.mxu0 %v430
    %v1221 = vpop.f32.mrf.mxu0
    %v1222 = vadd.f32 %v568, %v1221
    %v1223 = vpop.f32.mrf.mxu0
    %v1224 = vadd.f32 %v568, %v1223
    %1225 = vdwg.mxu0
    %1226 = vmatpush.bf16.msra.mxu0 %v986
    %1227 = vmatpush.bf16.msra.mxu0 %v984
    %1228 = vmatpush.bf16.msra.mxu0 %v982
    %1229 = vmatpush.bf16.msra.mxu0 %v980
    %1230 = vmatpush.bf16.msra.mxu0 %v978
    %1231 = vmatpush.bf16.msra.mxu0 %v976
    %1232 = vmatpush.bf16.msra.mxu0 %v974
    %1233 = vmatpush.bf16.msra.mxu0 %v972
    %1234 = vmatmul.bf16.gmra.mxu0 %v431
    %v1235 = vpop.f32.mrf.mxu0
    %v1236 = vadd.f32 %v1222, %v1235
    %v1237 = vpop.f32.mrf.mxu0
    %v1238 = vadd.f32 %v1224, %v1237
    %1239 = vdwg.mxu0
    %1240 = vmatpush.bf16.msra.mxu0 %v1002
    %1241 = vmatpush.bf16.msra.mxu0 %v1000
    %1242 = vmatpush.bf16.msra.mxu0 %v998
    %1243 = vmatpush.bf16.msra.mxu0 %v996
    %1244 = vmatpush.bf16.msra.mxu0 %v994
    %1245 = vmatpush.bf16.msra.mxu0 %v992
    %1246 = vmatpush.bf16.msra.mxu0 %v990
    %1247 = vmatpush.bf16.msra.mxu0 %v988
    %1248 = vmatmul.bf16.gmra.mxu0 %v432
    %v1249 = vpop.f32.mrf.mxu0
    %v1250 = vadd.f32 %v1236, %v1249
    %v1251 = vpop.f32.mrf.mxu0
    %v1252 = vadd.f32 %v1238, %v1251
    %1253 = vdwg.mxu0
    %1254 = vmatpush.bf16.msra.mxu0 %v1018
    %1255 = vmatpush.bf16.msra.mxu0 %v1016
    %1256 = vmatpush.bf16.msra.mxu0 %v1014
    %1257 = vmatpush.bf16.msra.mxu0 %v1012
    %1258 = vmatpush.bf16.msra.mxu0 %v1010
    %1259 = vmatpush.bf16.msra.mxu0 %v1008
    %1260 = vmatpush.bf16.msra.mxu0 %v1006
    %1261 = vmatpush.bf16.msra.mxu0 %v1004
    %1262 = vmatmul.bf16.gmra.mxu0 %v433
    %v1263 = vpop.f32.mrf.mxu0
    %v1264 = vadd.f32 %v1250, %v1263
    %v1265 = vpop.f32.mrf.mxu0
    %v1266 = vadd.f32 %v1252, %v1265
    %1267 = vdwg.mxu0
    %1268 = vmatpush.bf16.msra.mxu0 %v1034
    %1269 = vmatpush.bf16.msra.mxu0 %v1032
    %1270 = vmatpush.bf16.msra.mxu0 %v1030
    %1271 = vmatpush.bf16.msra.mxu0 %v1028
    %1272 = vmatpush.bf16.msra.mxu0 %v1026
    %1273 = vmatpush.bf16.msra.mxu0 %v1024
    %1274 = vmatpush.bf16.msra.mxu0 %v1022
    %1275 = vmatpush.bf16.msra.mxu0 %v1020
    %1276 = vmatmul.bf16.gmra.mxu0 %v434
    %v1277 = vpop.f32.mrf.mxu0
    %v1278 = vadd.f32 %v1264, %v1277
    %v1279 = vpop.f32.mrf.mxu0
    %v1280 = vadd.f32 %v1266, %v1279
    %1281 = vdwg.mxu0
    %1282 = vmatpush.bf16.msra.mxu0 %v1050
    %1283 = vmatpush.bf16.msra.mxu0 %v1048
    %1284 = vmatpush.bf16.msra.mxu0 %v1046
    %1285 = vmatpush.bf16.msra.mxu0 %v1044
    %1286 = vmatpush.bf16.msra.mxu0 %v1042
    %1287 = vmatpush.bf16.msra.mxu0 %v1040
    %1288 = vmatpush.bf16.msra.mxu0 %v1038
    %1289 = vmatpush.bf16.msra.mxu0 %v1036
    %1290 = vmatmul.bf16.gmra.mxu0 %v435
    %v1291 = vpop.f32.mrf.mxu0
    %v1292 = vadd.f32 %v1278, %v1291
    %v1293 = vpop.f32.mrf.mxu0
    %v1294 = vadd.f32 %v1280, %v1293
    %1295 = vdwg.mxu0
    %1296 = vmatpush.bf16.msra.mxu0 %v1066
    %1297 = vmatpush.bf16.msra.mxu0 %v1064
    %1298 = vmatpush.bf16.msra.mxu0 %v1062
    %1299 = vmatpush.bf16.msra.mxu0 %v1060
    %1300 = vmatpush.bf16.msra.mxu0 %v1058
    %1301 = vmatpush.bf16.msra.mxu0 %v1056
    %1302 = vmatpush.bf16.msra.mxu0 %v1054
    %1303 = vmatpush.bf16.msra.mxu0 %v1052
    %1304 = vmatmul.bf16.gmra.mxu0 %v436
    %v1305 = vpop.f32.mrf.mxu0
    %v1306 = vadd.f32 %v1292, %v1305
    %v1307 = vpop.f32.mrf.mxu0
    %v1308 = vadd.f32 %v1294, %v1307
    %1309 = vdwg.mxu0
    %1310 = vmatpush.bf16.msra.mxu0 %v1082
    %1311 = vmatpush.bf16.msra.mxu0 %v1080
    %1312 = vmatpush.bf16.msra.mxu0 %v1078
    %1313 = vmatpush.bf16.msra.mxu0 %v1076
    %1314 = vmatpush.bf16.msra.mxu0 %v1074
    %1315 = vmatpush.bf16.msra.mxu0 %v1072
    %1316 = vmatpush.bf16.msra.mxu0 %v1070
    %1317 = vmatpush.bf16.msra.mxu0 %v1068
    %1318 = vmatmul.bf16.gmra.mxu0 %v437
    %v1319 = vpop.f32.mrf.mxu0
    %v1320 = vadd.f32 %v1306, %v1319
    %v1321 = vpop.f32.mrf.mxu0
    %v1322 = vadd.f32 %v1308, %v1321
    %1323 = vdwg.mxu0
    %1324 = vmatpush.bf16.msra.mxu0 %v971
    %1325 = vmatpush.bf16.msra.mxu0 %v969
    %1326 = vmatpush.bf16.msra.mxu0 %v967
    %1327 = vmatpush.bf16.msra.mxu0 %v965
    %1328 = vmatpush.bf16.msra.mxu0 %v963
    %1329 = vmatpush.bf16.msra.mxu0 %v961
    %1330 = vmatpush.bf16.msra.mxu0 %v959
    %1331 = vmatpush.bf16.msra.mxu0 %v957
    %1332 = vmatmul.bf16.gmra.mxu0 %v430
    %v1333 = vpop.f32.mrf.mxu0
    %v1334 = vadd.f32 %v569, %v1333
    %v1335 = vpop.f32.mrf.mxu0
    %v1336 = vadd.f32 %v569, %v1335
    %1337 = vdwg.mxu0
    %1338 = vmatpush.bf16.msra.mxu0 %v987
    %1339 = vmatpush.bf16.msra.mxu0 %v985
    %1340 = vmatpush.bf16.msra.mxu0 %v983
    %1341 = vmatpush.bf16.msra.mxu0 %v981
    %1342 = vmatpush.bf16.msra.mxu0 %v979
    %1343 = vmatpush.bf16.msra.mxu0 %v977
    %1344 = vmatpush.bf16.msra.mxu0 %v975
    %1345 = vmatpush.bf16.msra.mxu0 %v973
    %1346 = vmatmul.bf16.gmra.mxu0 %v431
    %v1347 = vpop.f32.mrf.mxu0
    %v1348 = vadd.f32 %v1334, %v1347
    %v1349 = vpop.f32.mrf.mxu0
    %v1350 = vadd.f32 %v1336, %v1349
    %1351 = vdwg.mxu0
    %1352 = vmatpush.bf16.msra.mxu0 %v1003
    %1353 = vmatpush.bf16.msra.mxu0 %v1001
    %1354 = vmatpush.bf16.msra.mxu0 %v999
    %1355 = vmatpush.bf16.msra.mxu0 %v997
    %1356 = vmatpush.bf16.msra.mxu0 %v995
    %1357 = vmatpush.bf16.msra.mxu0 %v993
    %1358 = vmatpush.bf16.msra.mxu0 %v991
    %1359 = vmatpush.bf16.msra.mxu0 %v989
    %1360 = vmatmul.bf16.gmra.mxu0 %v432
    %v1361 = vpop.f32.mrf.mxu0
    %v1362 = vadd.f32 %v1348, %v1361
    %v1363 = vpop.f32.mrf.mxu0
    %v1364 = vadd.f32 %v1350, %v1363
    %1365 = vdwg.mxu0
    %1366 = vmatpush.bf16.msra.mxu0 %v1019
    %1367 = vmatpush.bf16.msra.mxu0 %v1017
    %1368 = vmatpush.bf16.msra.mxu0 %v1015
    %1369 = vmatpush.bf16.msra.mxu0 %v1013
    %1370 = vmatpush.bf16.msra.mxu0 %v1011
    %1371 = vmatpush.bf16.msra.mxu0 %v1009
    %1372 = vmatpush.bf16.msra.mxu0 %v1007
    %1373 = vmatpush.bf16.msra.mxu0 %v1005
    %1374 = vmatmul.bf16.gmra.mxu0 %v433
    %v1375 = vpop.f32.mrf.mxu0
    %v1376 = vadd.f32 %v1362, %v1375
    %v1377 = vpop.f32.mrf.mxu0
    %v1378 = vadd.f32 %v1364, %v1377
    %1379 = vdwg.mxu0
    %1380 = vmatpush.bf16.msra.mxu0 %v1035
    %1381 = vmatpush.bf16.msra.mxu0 %v1033
    %1382 = vmatpush.bf16.msra.mxu0 %v1031
    %1383 = vmatpush.bf16.msra.mxu0 %v1029
    %1384 = vmatpush.bf16.msra.mxu0 %v1027
    %1385 = vmatpush.bf16.msra.mxu0 %v1025
    %1386 = vmatpush.bf16.msra.mxu0 %v1023
    %1387 = vmatpush.bf16.msra.mxu0 %v1021
    %1388 = vmatmul.bf16.gmra.mxu0 %v434
    %v1389 = vpop.f32.mrf.mxu0
    %v1390 = vadd.f32 %v1376, %v1389
    %v1391 = vpop.f32.mrf.mxu0
    %v1392 = vadd.f32 %v1378, %v1391
    %1393 = vdwg.mxu0
    %1394 = vmatpush.bf16.msra.mxu0 %v1051
    %1395 = vmatpush.bf16.msra.mxu0 %v1049
    %1396 = vmatpush.bf16.msra.mxu0 %v1047
    %1397 = vmatpush.bf16.msra.mxu0 %v1045
    %1398 = vmatpush.bf16.msra.mxu0 %v1043
    %1399 = vmatpush.bf16.msra.mxu0 %v1041
    %1400 = vmatpush.bf16.msra.mxu0 %v1039
    %1401 = vmatpush.bf16.msra.mxu0 %v1037
    %1402 = vmatmul.bf16.gmra.mxu0 %v435
    %v1403 = vpop.f32.mrf.mxu0
    %v1404 = vadd.f32 %v1390, %v1403
    %v1405 = vpop.f32.mrf.mxu0
    %v1406 = vadd.f32 %v1392, %v1405
    %1407 = vdwg.mxu0
    %1408 = vmatpush.bf16.msra.mxu0 %v1067
    %1409 = vmatpush.bf16.msra.mxu0 %v1065
    %1410 = vmatpush.bf16.msra.mxu0 %v1063
    %1411 = vmatpush.bf16.msra.mxu0 %v1061
    %1412 = vmatpush.bf16.msra.mxu0 %v1059
    %1413 = vmatpush.bf16.msra.mxu0 %v1057
    %1414 = vmatpush.bf16.msra.mxu0 %v1055
    %1415 = vmatpush.bf16.msra.mxu0 %v1053
    %1416 = vmatmul.bf16.gmra.mxu0 %v436
    %v1417 = vpop.f32.mrf.mxu0
    %v1418 = vadd.f32 %v1404, %v1417
    %v1419 = vpop.f32.mrf.mxu0
    %v1420 = vadd.f32 %v1406, %v1419
    %1421 = vdwg.mxu0
    %1422 = vmatpush.bf16.msra.mxu0 %v1083
    %1423 = vmatpush.bf16.msra.mxu0 %v1081
    %1424 = vmatpush.bf16.msra.mxu0 %v1079
    %1425 = vmatpush.bf16.msra.mxu0 %v1077
    %1426 = vmatpush.bf16.msra.mxu0 %v1075
    %1427 = vmatpush.bf16.msra.mxu0 %v1073
    %1428 = vmatpush.bf16.msra.mxu0 %v1071
    %1429 = vmatpush.bf16.msra.mxu0 %v1069
    %1430 = vmatmul.bf16.gmra.mxu0 %v437
    %v1431 = vpop.f32.mrf.mxu0
    %v1432 = vadd.f32 %v1418, %v1431
    %v1433 = vpop.f32.mrf.mxu0
    %v1434 = vadd.f32 %v1420, %v1433
    %1435 = vdwg.mxu0
    %v1436 = vmul.f32 %v1320, 0.01
    %v1437 = vmul.f32 %v1432, 0.01
    %v1438 = vmul.f32 %v1322, 0.01
    %v1439 = vmul.f32 %v1434, 0.01
    %v1440 = vmax.f32 %v1320, %v1436
    %v1441 = vmax.f32 %v1432, %v1437
    %v1442 = vmax.f32 %v1322, %v1438
    %v1443 = vmax.f32 %v1434, %v1439
    %v1444 = vpack.c.bf16 %v1442, %v1440
    %v1445 = vpack.c.bf16 %v1443, %v1441
    %v1446 = vld [vmem:[%s5] sm:$0xf]
    %v1447 = vld [vmem:[%s5 + $0x4] sm:$0xf]
    %v1448 = vld [vmem:[%s5 + $0x8] sm:$0xf]
    %v1449 = vld [vmem:[%s5 + $0xc] sm:$0xf]
    %v1450 = vld [vmem:[%s5 + $0x10] sm:$0xf]
    %v1451 = vld [vmem:[%s5 + $0x14] sm:$0xf]
    %v1452 = vld [vmem:[%s5 + $0x18] sm:$0xf]
    %v1453 = vld [vmem:[%s5 + $0x1c] sm:$0xf]
    %v1454 = vld [vmem:[%s5 + $0x20] sm:$0xf]
    %v1455 = vld [vmem:[%s5 + $0x24] sm:$0xf]
    %v1456 = vld [vmem:[%s5 + $0x28] sm:$0xf]
    %v1457 = vld [vmem:[%s5 + $0x2c] sm:$0xf]
    %v1458 = vld [vmem:[%s5 + $0x30] sm:$0xf]
    %v1459 = vld [vmem:[%s5 + $0x34] sm:$0xf]
    %v1460 = vld [vmem:[%s5 + $0x38] sm:$0xf]
    %v1461 = vld [vmem:[%s5 + $0x3c] sm:$0xf]
    %v1462 = vld [vmem:[%s5 + $0x40] sm:$0xf]
    %v1463 = vld [vmem:[%s5 + $0x44] sm:$0xf]
    %v1464 = vld [vmem:[%s5 + $0x48] sm:$0xf]
    %v1465 = vld [vmem:[%s5 + $0x4c] sm:$0xf]
    %v1466 = vld [vmem:[%s5 + $0x50] sm:$0xf]
    %v1467 = vld [vmem:[%s5 + $0x54] sm:$0xf]
    %v1468 = vld [vmem:[%s5 + $0x58] sm:$0xf]
    %v1469 = vld [vmem:[%s5 + $0x5c] sm:$0xf]
    %v1470 = vld [vmem:[%s5 + $0x60] sm:$0xf]
    %v1471 = vld [vmem:[%s5 + $0x64] sm:$0xf]
    %v1472 = vld [vmem:[%s5 + $0x68] sm:$0xf]
    %v1473 = vld [vmem:[%s5 + $0x6c] sm:$0xf]
    %v1474 = vld [vmem:[%s5 + $0x70] sm:$0xf]
    %v1475 = vld [vmem:[%s5 + $0x74] sm:$0xf]
    %v1476 = vld [vmem:[%s5 + $0x78] sm:$0xf]
    %v1477 = vld [vmem:[%s5 + $0x7c] sm:$0xf]
    %v1478 = vld [vmem:[%s6] sm:$0x1]
    %v1480 = vperm.slane %v1478, 0
    %v1514 = vunpack.c.l.b16 %v1446
    %v1515 = vunpack.c.l.b16 %v1447
    %v1516 = vunpack.c.l.b16 %v1448
    %v1517 = vunpack.c.l.b16 %v1449
    %v1518 = vunpack.c.l.b16 %v1450
    %v1519 = vunpack.c.l.b16 %v1451
    %v1520 = vunpack.c.l.b16 %v1452
    %v1521 = vunpack.c.l.b16 %v1453
    %v1522 = vunpack.c.l.b16 %v1454
    %v1523 = vunpack.c.l.b16 %v1455
    %v1524 = vunpack.c.l.b16 %v1456
    %v1525 = vunpack.c.l.b16 %v1457
    %v1526 = vunpack.c.l.b16 %v1458
    %v1527 = vunpack.c.l.b16 %v1459
    %v1528 = vunpack.c.l.b16 %v1460
    %v1529 = vunpack.c.l.b16 %v1461
    %v1530 = vunpack.c.l.b16 %v1462
    %v1531 = vunpack.c.l.b16 %v1463
    %v1532 = vunpack.c.l.b16 %v1464
    %v1533 = vunpack.c.l.b16 %v1465
    %v1534 = vunpack.c.l.b16 %v1466
    %v1535 = vunpack.c.l.b16 %v1467
    %v1536 = vunpack.c.l.b16 %v1468
    %v1537 = vunpack.c.l.b16 %v1469
    %v1538 = vunpack.c.l.b16 %v1470
    %v1539 = vunpack.c.l.b16 %v1471
    %v1540 = vunpack.c.l.b16 %v1472
    %v1541 = vunpack.c.l.b16 %v1473
    %v1542 = vunpack.c.l.b16 %v1474
    %v1543 = vunpack.c.l.b16 %v1475
    %v1544 = vunpack.c.l.b16 %v1476
    %v1545 = vunpack.c.l.b16 %v1477
    %v1546 = vpack.c.b16 %v1515, %v1514
    %v1547 = vpack.c.b16 %v1517, %v1516
    %v1548 = vpack.c.b16 %v1519, %v1518
    %v1549 = vpack.c.b16 %v1521, %v1520
    %v1550 = vpack.c.b16 %v1523, %v1522
    %v1551 = vpack.c.b16 %v1525, %v1524
    %v1552 = vpack.c.b16 %v1527, %v1526
    %v1553 = vpack.c.b16 %v1529, %v1528
    %v1554 = vpack.c.b16 %v1531, %v1530
    %v1555 = vpack.c.b16 %v1533, %v1532
    %v1556 = vpack.c.b16 %v1535, %v1534
    %v1557 = vpack.c.b16 %v1537, %v1536
    %v1558 = vpack.c.b16 %v1539, %v1538
    %v1559 = vpack.c.b16 %v1541, %v1540
    %v1560 = vpack.c.b16 %v1543, %v1542
    %v1561 = vpack.c.b16 %v1545, %v1544
    %1578 = vmatpush.bf16.msra.mxu0 %v1553
    %1579 = vmatpush.bf16.msra.mxu0 %v1552
    %1580 = vmatpush.bf16.msra.mxu0 %v1551
    %1581 = vmatpush.bf16.msra.mxu0 %v1550
    %1582 = vmatpush.bf16.msra.mxu0 %v1549
    %1583 = vmatpush.bf16.msra.mxu0 %v1548
    %1584 = vmatpush.bf16.msra.mxu0 %v1547
    %1585 = vmatpush.bf16.msra.mxu0 %v1546
    %1586 = vmatmul.bf16.gmra.mxu0 %v1444
    %v1587 = vpop.f32.mrf.mxu0
    %v1588 = vadd.f32 %v1480, %v1587
    %v1589 = vpop.f32.mrf.mxu0
    %v1590 = vadd.f32 %v1480, %v1589
    %1591 = vdwg.mxu0
    %1592 = vmatpush.bf16.msra.mxu0 %v1561
    %1593 = vmatpush.bf16.msra.mxu0 %v1560
    %1594 = vmatpush.bf16.msra.mxu0 %v1559
    %1595 = vmatpush.bf16.msra.mxu0 %v1558
    %1596 = vmatpush.bf16.msra.mxu0 %v1557
    %1597 = vmatpush.bf16.msra.mxu0 %v1556
    %1598 = vmatpush.bf16.msra.mxu0 %v1555
    %1599 = vmatpush.bf16.msra.mxu0 %v1554
    %1600 = vmatmul.bf16.gmra.mxu0 %v1445
    %v1601 = vpop.f32.mrf.mxu0
    %v1602 = vadd.f32 %v1588, %v1601
    %v1603 = vpop.f32.mrf.mxu0
    %v1604 = vadd.f32 %v1590, %v1603
    %1605 = vdwg.mxu0
    %v1606 = vmul.f32 %v1602, 0.01
    %v1607 = vmul.f32 %v1604, 0.01
    %v1608 = vmax.f32 %v1602, %v1606
    %v1609 = vmax.f32 %v1604, %v1607
    %v1610 = vpack.c.bf16 %v1609, %v1608
    %v1611 = vld [vmem:[%s7] sm:$0xf]
    %v1612 = vld [vmem:[%s7 + $0x4] sm:$0xf]
    %v1613 = vld [vmem:[%s7 + $0x8] sm:$0xf]
    %v1614 = vld [vmem:[%s7 + $0xc] sm:$0xf]
    %v1615 = vld [vmem:[%s8] sm:$0x1]
    %v1617 = vperm.slane %v1615, 0
    %v1623 = vunpack.c.l.b16 %v1611
    %v1624 = vunpack.c.l.b16 %v1612
    %v1625 = vunpack.c.l.b16 %v1613
    %v1626 = vunpack.c.l.b16 %v1614
    %v1627 = vpack.c.b16 %v1624, %v1623
    %v1628 = vpack.c.b16 %v1626, %v1625
    %vm1631 = vcmask 261120
    %v1633 = vsel %vm1631, %v1610, 0
    %1635 = vmatpush.bf16.msra.mxu0 0
    %1636 = vmatpush.bf16.msra.mxu0 0
    %1637 = vmatpush.bf16.msra.mxu0 0
    %1638 = vmatpush.bf16.msra.mxu0 0
    %1639 = vmatpush.bf16.msra.mxu0 0
    %1640 = vmatpush.bf16.msra.mxu0 0
    %1641 = vmatpush.bf16.msra.mxu0 %v1628
    %1642 = vmatpush.bf16.msra.mxu0 %v1627
    %1643 = vmatmul.bf16.gmra.mxu0 %v1633
    %v1644 = vpop.f32.mrf.mxu0
    %v1645 = vadd.f32 %v1617, %v1644
    %v1646 = vpop.f32.mrf.mxu0
    %v1647 = vadd.f32 %v1617, %v1646
    %1648 = vdwg.mxu0
    %vm1649 = vcmask 64512
    %1650 = vst.msk [vmem:[%s9] sm:$0xff] %vm1649, %v1645
    %1651 = vst.msk [vmem:[%s9 + $0x8] sm:$0xff] %vm1649, %v1647
    // Predicated region
    $region46: #{model_forward.1} parent=1 // pred_check
      _
    $region47: #{model_forward.1} parent=1 // pred_check_branch
      %1653 = sbr.rel (0) target = $region49
    $region48: #{model_forward.1} parent=1 // pred_region
      _
    $region49: #{model_forward.1} parent=1 // pred_fallthru
      _
    // Predicated region
    $region50: #{model_forward.1} parent=1 // pred_check
      _
    $region51: #{model_forward.1} parent=1 // pred_check_branch
      %1655 = sbr.rel (0) target = $region53
    $region52: #{model_forward.1} parent=1 // pred_region
      _
    $region53: #{model_forward.1} parent=1 // pred_fallthru
      _
    %1656 = vsyncpa [#allocation3], 1
    %1657 = vsyncpa [#allocation5], 1

</llo_original>
